<compile_context>
chip_gen: v7x
topology: tpu7x:2x2x1
jax: 0.10.0
libtpu: 0.0.40
codegen_flags: <defaults>
</compile_context>

<pallas_src>
import jax
import jax.numpy as jnp
from jax.experimental import pallas as pl
from jax.experimental.pallas import tpu as pltpu

IGNORE_INDEX = 255


def cross_entropy_sum_loss(pred, label, *, tile_rows=2048):
    """pred: (B, C, H, W) float, label: (B, H, W) int. Returns scalar f32 loss."""
    B, C, H, W = pred.shape
    # Exact torch semantics: view(-1, C) on the NCHW tensor, view(-1) on the label.
    # NOTE: on NCHW data this mixes the class axis with spatial axes (rows are not
    # pixels) — faithful to the original module.
    pred2 = pred.reshape(-1, C)                    # (N, C), zero-copy, native dtype
    lab2 = label.reshape(-1, 1).astype(jnp.int32)  # (N, 1)
    N = pred2.shape[0]                             # static Python int

    # Tile rows: multiple of 8, never larger than needed to cover N in one block.
    tm = max(8, (min(int(tile_rows), ((N + 7) // 8) * 8) // 8) * 8)
    nblk = pl.cdiv(N, tm)

    def kernel(pred_ref, label_ref, out_ref):
        # pred_ref:  (tm, C)      logits, natural class dim (no lane padding of data)
        # label_ref: (tm, 1) i32  targets (garbage in tail rows, masked below)
        # out_ref:   (1, 8, 128)  f32 — this block's partial sum, broadcast-filled
        logits = pred_ref[...].astype(jnp.float32)
        lbl = label_ref[...]

        # numerically stable log-sum-exp per row
        m = jnp.max(logits, axis=-1, keepdims=True)
        lse = m + jnp.log(jnp.sum(jnp.exp(logits - m), axis=-1, keepdims=True))

        # gather the target logit via lane-index compare + masked lane-sum
        col = jax.lax.broadcasted_iota(jnp.int32, logits.shape, 1)
        tgt = jnp.sum(jnp.where(col == lbl, logits, 0.0), axis=-1, keepdims=True)

        # mask ignore_index rows and the out-of-range rows of a partial tail block
        row = pl.program_id(0) * tm + jax.lax.broadcasted_iota(jnp.int32, (tm, 1), 0)
        valid = (lbl != IGNORE_INDEX) & (row < N)
        # TODO(synk): labels in (C-1, 255) silently contribute `lse` (tgt gathers 0)
        # instead of raising like torch; inputs are assumed clean.
        per_row = jnp.where(valid, lse - tgt, 0.0)     # (tm, 1)

        out_ref[...] = jnp.full(out_ref.shape, jnp.sum(per_row), dtype=jnp.float32)

    out = pl.pallas_call(
        kernel,
        out_shape=jax.ShapeDtypeStruct((nblk, 8, 128), jnp.float32),
        grid_spec=pltpu.PrefetchScalarGridSpec(
            num_scalar_prefetch=0,
            grid=(nblk,),
            in_specs=[
                pl.BlockSpec((tm, C), lambda i: (i, 0)),
                pl.BlockSpec((tm, 1), lambda i: (i, 0)),
            ],
            out_specs=pl.BlockSpec((1, 8, 128), lambda i: (i, 0, 0)),
        ),
        compiler_params=pltpu.CompilerParams(
            dimension_semantics=("parallel",)),  # independent partials -> megacore OK
    )(pred2, lab2)

    return jnp.sum(out[:, 0, 0])


def _reference_loss(pred, label):
    """Plain-JAX reference mirroring the torch module."""
    B, C, H, W = pred.shape
    p = pred.reshape(-1, C).astype(jnp.float32)
    l = label.reshape(-1).astype(jnp.int32)
    lse = jax.scipy.special.logsumexp(p, axis=-1)
    safe_l = jnp.where(l == IGNORE_INDEX, 0, l)
    tgt = jnp.take_along_axis(p, safe_l[:, None], axis=-1)[:, 0]
    per = jnp.where(l == IGNORE_INDEX, 0.0, lse - tgt)
    return jnp.sum(per)


if __name__ == "__main__":
    B, C, H, W = 2, 4, 16, 16
    key = jax.random.PRNGKey(0)
    k_pred, k_lab, k_ign = jax.random.split(key, 3)

    pred = jax.random.normal(k_pred, (B, C, H, W), dtype=jnp.float32)
    label = jax.random.randint(k_lab, (B, H, W), 0, C, dtype=jnp.int32)
    # sprinkle in some ignore_index pixels to exercise the masking path
    ignore_mask = jax.random.uniform(k_ign, (B, H, W)) < 0.1
    label = jnp.where(ignore_mask, IGNORE_INDEX, label)

    loss = cross_entropy_sum_loss(pred, label)
    loss = jax.block_until_ready(loss)

    ref = jax.block_until_ready(_reference_loss(pred, label))
    assert jnp.allclose(loss, ref, rtol=1e-5, atol=1e-4), (loss, ref)

    print("KERNEL_OK")
</pallas_src>

<mosaic_0001>
module attributes {stable_mosaic.version = 11 : i64} {
  func.func @kernel(%arg0: i32, %arg1: memref<512x4xf32, #tpu.memory_space<vmem>>, %arg2: memref<512x1xi32, #tpu.memory_space<vmem>>, %arg3: memref<1x8x128xf32, #tpu.memory_space<vmem>>) attributes {dimension_semantics = [#tpu.dimension_semantics<parallel>], iteration_bounds = array<i64: 1>, scalar_prefetch = 0 : i64, scratch_operands = 0 : i64, tpu.core_type = #tpu.core_type<tc>, window_params = [{transform_indices = @transform_0, window_bounds = array<i64: 512, 4>}, {transform_indices = @transform_1, window_bounds = array<i64: 512, 1>}, {transform_indices = @transform_2, window_bounds = array<i64: 1, 8, 128>}]} {
    %c0 = arith.constant 0 : index
    %c0_0 = arith.constant 0 : index
    %0 = vector.load %arg1[%c0, %c0_0] : memref<512x4xf32, #tpu.memory_space<vmem>>, vector<512x4xf32>
    %c0_1 = arith.constant 0 : index
    %c0_2 = arith.constant 0 : index
    %1 = vector.load %arg2[%c0_1, %c0_2] : memref<512x1xi32, #tpu.memory_space<vmem>>, vector<512x1xi32>
    %cst = arith.constant dense<0xFF800000> : vector<512xf32>
    %2 = vector.multi_reduction <maximumf>, %0, %cst [1] : vector<512x4xf32> to vector<512xf32>
    %3 = vector.shape_cast %2 : vector<512xf32> to vector<512x1xf32>
    %4 = vector.broadcast %3 : vector<512x1xf32> to vector<512x4xf32>
    %5 = arith.subf %0, %4 : vector<512x4xf32>
    %6 = math.exp %5 : vector<512x4xf32>
    %cst_3 = arith.constant dense<0.000000e+00> : vector<512xf32>
    %7 = vector.multi_reduction <add>, %6, %cst_3 [1] : vector<512x4xf32> to vector<512xf32>
    %8 = vector.shape_cast %7 : vector<512xf32> to vector<512x1xf32>
    %9 = math.log %8 : vector<512x1xf32>
    %10 = arith.addf %3, %9 : vector<512x1xf32>
    %11 = tpu.iota {dimensions = array<i32: 1>} : vector<512x4xi32>
    %12 = vector.broadcast %1 : vector<512x1xi32> to vector<512x4xi32>
    %13 = arith.cmpi eq, %11, %12 : vector<512x4xi32>
    %cst_4 = arith.constant 0.000000e+00 : f32
    %14 = vector.broadcast %cst_4 : f32 to vector<512x4xf32>
    %15 = arith.select %13, %0, %14 : vector<512x4xi1>, vector<512x4xf32>
    %cst_5 = arith.constant dense<0.000000e+00> : vector<512xf32>
    %16 = vector.multi_reduction <add>, %15, %cst_5 [1] : vector<512x4xf32> to vector<512xf32>
    %17 = vector.shape_cast %16 : vector<512xf32> to vector<512x1xf32>
    %c512_i32 = arith.constant 512 : i32
    %18 = arith.muli %arg0, %c512_i32 : i32
    %19 = tpu.iota {dimensions = array<i32: 0>} : vector<512x1xi32>
    %20 = vector.broadcast %18 : i32 to vector<512x1xi32>
    %21 = arith.addi %20, %19 : vector<512x1xi32>
    %c255_i32 = arith.constant 255 : i32
    %22 = vector.broadcast %c255_i32 : i32 to vector<512x1xi32>
    %23 = arith.cmpi ne, %1, %22 : vector<512x1xi32>
    %c512_i32_6 = arith.constant 512 : i32
    %24 = vector.broadcast %c512_i32_6 : i32 to vector<512x1xi32>
    %25 = arith.cmpi slt, %21, %24 : vector<512x1xi32>
    %26 = arith.andi %23, %25 : vector<512x1xi1>
    %27 = arith.subf %10, %17 : vector<512x1xf32>
    %cst_7 = arith.constant 0.000000e+00 : f32
    %28 = vector.broadcast %cst_7 : f32 to vector<512x1xf32>
    %29 = arith.select %26, %27, %28 : vector<512x1xi1>, vector<512x1xf32>
    %30 = vector.shape_cast %29 : vector<512x1xf32> to vector<1x512x1xf32>
    %cst_8 = arith.constant dense<0.000000e+00> : vector<1xf32>
    %31 = vector.multi_reduction <add>, %30, %cst_8 [1, 2] : vector<1x512x1xf32> to vector<1xf32>
    %32 = vector.shape_cast %31 : vector<1xf32> to vector<1x1x1xf32>
    %33 = vector.extract %32[0, 0, 0] : f32 from vector<1x1x1xf32>
    %34 = vector.broadcast %33 : f32 to vector<1x8x128xf32>
    %c0_9 = arith.constant 0 : index
    %c0_10 = arith.constant 0 : index
    %c0_11 = arith.constant 0 : index
    %35 = vector.load %arg3[%c0_9, %c0_10, %c0_11] : memref<1x8x128xf32, #tpu.memory_space<vmem>>, vector<1x8x128xf32>
    tpu.vector_store %arg3[%c0_9, %c0_10, %c0_11], %34 {strides = array<i32>} : memref<1x8x128xf32, #tpu.memory_space<vmem>>, vector<1x8x128xf32>,
    return
  }
  func.func @transform_0(%arg0: i32) -> (i32, i32) {
    %c0_i32 = arith.constant 0 : i32
    %c0_i32_0 = arith.constant 0 : i32
    return %arg0, %c0_i32 : i32, i32
  }
  func.func @transform_1(%arg0: i32) -> (i32, i32) {
    %c0_i32 = arith.constant 0 : i32
    %c0_i32_0 = arith.constant 0 : i32
    return %arg0, %c0_i32 : i32, i32
  }
  func.func @transform_2(%arg0: i32) -> (i32, i32, i32) {
    %c0_i32 = arith.constant 0 : i32
    %c0_i32_0 = arith.constant 0 : i32
    %c0_i32_1 = arith.constant 0 : i32
    return %arg0, %c0_i32, %c0_i32_0 : i32, i32, i32
  }
}

</mosaic_0001>

<llo_original>
// kernel: tpu_custom_call.1
$region0: #{tpu_custom_call.1}
  #allocation0 [shape = 'u32[]', space=smem, size = 0x4, offset = 0x4, fixed_abs, tag = 'smem constant byte address 0x4 - core index']
  #allocation1 [shape = 'u32[144,128]{1,0:T(1,128)}', space=vmem, size = 0x12000, scoped, tag = 'internal scratch']
  %s0 = inlined_call_operand.vmem [shape: f32[512,4], index: 0, kind: input, shape index: {}]
  %s1 = inlined_call_operand.vmem [shape: s32[512,1], index: 1, kind: input, shape index: {}]
  %s2 = inlined_call_operand.hbm [shape: f32[1,8,128], index: 2, kind: output, shape index: {}]
  %s3 = sld [smem:[#allocation0]]
  $region18: #{tpu_custom_call.1} parent=0
    _
  %s5 = ssub.s32 1, %s3
  %s6 = scalar_select 0, %s5, %s3
  $region1: #{tpu_custom_call.1} parent=0
    #allocation2 [shape = 'u8[4096]{0}', space=vmem, size = 0x1000, scoped, tag = 'output window, operand 0, single buffered']
    #allocation3 [shape = 's32[1]{0}', space=sflag, size = 0x4, scoped, tag = 'scoped memory for tpu_custom_call.1']
    %7 = vsyncpa [#allocation3], 0
    // Predicated region
    $region2: #{tpu_custom_call.1} parent=1 // pred_check
      _
    $region3: #{tpu_custom_call.1} parent=1 // pred_check_branch
      %9 = sbr.rel (0) target = $region5
    $region4: #{tpu_custom_call.1} parent=1 // pred_region
      _
    $region5: #{tpu_custom_call.1} parent=1 // pred_fallthru
      _
    // Predicated region
    $region6: #{tpu_custom_call.1} parent=1 // pred_check
      _
    $region7: #{tpu_custom_call.1} parent=1 // pred_check_branch
      %11 = sbr.rel (0) target = $region9
    $region8: #{tpu_custom_call.1} parent=1 // pred_region
      _
    $region9: #{tpu_custom_call.1} parent=1 // pred_fallthru
      _
    %v12 = vld [vmem:[%s0] sm:$0xff]
    %v13 = vld [vmem:[%s0 + $0x8] sm:$0xff]
    %v14 = vld [vmem:[%s0 + $0x10] sm:$0xff]
    %v15 = vld [vmem:[%s0 + $0x18] sm:$0xff]
    %v16 = vld [vmem:[%s0 + $0x20] sm:$0xff]
    %v17 = vld [vmem:[%s0 + $0x28] sm:$0xff]
    %v18 = vld [vmem:[%s0 + $0x30] sm:$0xff]
    %v19 = vld [vmem:[%s0 + $0x38] sm:$0xff]
    %v20 = vld [vmem:[%s0 + $0x40] sm:$0xff]
    %v21 = vld [vmem:[%s0 + $0x48] sm:$0xff]
    %v22 = vld [vmem:[%s0 + $0x50] sm:$0xff]
    %v23 = vld [vmem:[%s0 + $0x58] sm:$0xff]
    %v24 = vld [vmem:[%s0 + $0x60] sm:$0xff]
    %v25 = vld [vmem:[%s0 + $0x68] sm:$0xff]
    %v26 = vld [vmem:[%s0 + $0x70] sm:$0xff]
    %v27 = vld [vmem:[%s0 + $0x78] sm:$0xff]
    %v28 = vld [vmem:[%s0 + $0x80] sm:$0xff]
    %v29 = vld [vmem:[%s0 + $0x88] sm:$0xff]
    %v30 = vld [vmem:[%s0 + $0x90] sm:$0xff]
    %v31 = vld [vmem:[%s0 + $0x98] sm:$0xff]
    %v32 = vld [vmem:[%s0 + $0xa0] sm:$0xff]
    %v33 = vld [vmem:[%s0 + $0xa8] sm:$0xff]
    %v34 = vld [vmem:[%s0 + $0xb0] sm:$0xff]
    %v35 = vld [vmem:[%s0 + $0xb8] sm:$0xff]
    %v36 = vld [vmem:[%s0 + $0xc0] sm:$0xff]
    %v37 = vld [vmem:[%s0 + $0xc8] sm:$0xff]
    %v38 = vld [vmem:[%s0 + $0xd0] sm:$0xff]
    %v39 = vld [vmem:[%s0 + $0xd8] sm:$0xff]
    %v40 = vld [vmem:[%s0 + $0xe0] sm:$0xff]
    %v41 = vld [vmem:[%s0 + $0xe8] sm:$0xff]
    %v42 = vld [vmem:[%s0 + $0xf0] sm:$0xff]
    %v43 = vld [vmem:[%s0 + $0xf8] sm:$0xff]
    %v44 = vld [vmem:[%s0 + $0x100] sm:$0xff]
    %v45 = vld [vmem:[%s0 + $0x108] sm:$0xff]
    %v46 = vld [vmem:[%s0 + $0x110] sm:$0xff]
    %v47 = vld [vmem:[%s0 + $0x118] sm:$0xff]
    %v48 = vld [vmem:[%s0 + $0x120] sm:$0xff]
    %v49 = vld [vmem:[%s0 + $0x128] sm:$0xff]
    %v50 = vld [vmem:[%s0 + $0x130] sm:$0xff]
    %v51 = vld [vmem:[%s0 + $0x138] sm:$0xff]
    %v52 = vld [vmem:[%s0 + $0x140] sm:$0xff]
    %v53 = vld [vmem:[%s0 + $0x148] sm:$0xff]
    %v54 = vld [vmem:[%s0 + $0x150] sm:$0xff]
    %v55 = vld [vmem:[%s0 + $0x158] sm:$0xff]
    %v56 = vld [vmem:[%s0 + $0x160] sm:$0xff]
    %v57 = vld [vmem:[%s0 + $0x168] sm:$0xff]
    %v58 = vld [vmem:[%s0 + $0x170] sm:$0xff]
    %v59 = vld [vmem:[%s0 + $0x178] sm:$0xff]
    %v60 = vld [vmem:[%s0 + $0x180] sm:$0xff]
    %v61 = vld [vmem:[%s0 + $0x188] sm:$0xff]
    %v62 = vld [vmem:[%s0 + $0x190] sm:$0xff]
    %v63 = vld [vmem:[%s0 + $0x198] sm:$0xff]
    %v64 = vld [vmem:[%s0 + $0x1a0] sm:$0xff]
    %v65 = vld [vmem:[%s0 + $0x1a8] sm:$0xff]
    %v66 = vld [vmem:[%s0 + $0x1b0] sm:$0xff]
    %v67 = vld [vmem:[%s0 + $0x1b8] sm:$0xff]
    %v68 = vld [vmem:[%s0 + $0x1c0] sm:$0xff]
    %v69 = vld [vmem:[%s0 + $0x1c8] sm:$0xff]
    %v70 = vld [vmem:[%s0 + $0x1d0] sm:$0xff]
    %v71 = vld [vmem:[%s0 + $0x1d8] sm:$0xff]
    %v72 = vld [vmem:[%s0 + $0x1e0] sm:$0xff]
    %v73 = vld [vmem:[%s0 + $0x1e8] sm:$0xff]
    %v74 = vld [vmem:[%s0 + $0x1f0] sm:$0xff]
    %v75 = vld [vmem:[%s0 + $0x1f8] sm:$0xff]
    %v76 = vld [vmem:[%s1] sm:$0xff]
    %v77 = vld [vmem:[%s1 + $0x8] sm:$0xff]
    %v78 = vld [vmem:[%s1 + $0x10] sm:$0xff]
    %v79 = vld [vmem:[%s1 + $0x18] sm:$0xff]
    %v80 = vld [vmem:[%s1 + $0x20] sm:$0xff]
    %v81 = vld [vmem:[%s1 + $0x28] sm:$0xff]
    %v82 = vld [vmem:[%s1 + $0x30] sm:$0xff]
    %v83 = vld [vmem:[%s1 + $0x38] sm:$0xff]
    %v84 = vld [vmem:[%s1 + $0x40] sm:$0xff]
    %v85 = vld [vmem:[%s1 + $0x48] sm:$0xff]
    %v86 = vld [vmem:[%s1 + $0x50] sm:$0xff]
    %v87 = vld [vmem:[%s1 + $0x58] sm:$0xff]
    %v88 = vld [vmem:[%s1 + $0x60] sm:$0xff]
    %v89 = vld [vmem:[%s1 + $0x68] sm:$0xff]
    %v90 = vld [vmem:[%s1 + $0x70] sm:$0xff]
    %v91 = vld [vmem:[%s1 + $0x78] sm:$0xff]
    %v92 = vld [vmem:[%s1 + $0x80] sm:$0xff]
    %v93 = vld [vmem:[%s1 + $0x88] sm:$0xff]
    %v94 = vld [vmem:[%s1 + $0x90] sm:$0xff]
    %v95 = vld [vmem:[%s1 + $0x98] sm:$0xff]
    %v96 = vld [vmem:[%s1 + $0xa0] sm:$0xff]
    %v97 = vld [vmem:[%s1 + $0xa8] sm:$0xff]
    %v98 = vld [vmem:[%s1 + $0xb0] sm:$0xff]
    %v99 = vld [vmem:[%s1 + $0xb8] sm:$0xff]
    %v100 = vld [vmem:[%s1 + $0xc0] sm:$0xff]
    %v101 = vld [vmem:[%s1 + $0xc8] sm:$0xff]
    %v102 = vld [vmem:[%s1 + $0xd0] sm:$0xff]
    %v103 = vld [vmem:[%s1 + $0xd8] sm:$0xff]
    %v104 = vld [vmem:[%s1 + $0xe0] sm:$0xff]
    %v105 = vld [vmem:[%s1 + $0xe8] sm:$0xff]
    %v106 = vld [vmem:[%s1 + $0xf0] sm:$0xff]
    %v107 = vld [vmem:[%s1 + $0xf8] sm:$0xff]
    %v108 = vld [vmem:[%s1 + $0x100] sm:$0xff]
    %v109 = vld [vmem:[%s1 + $0x108] sm:$0xff]
    %v110 = vld [vmem:[%s1 + $0x110] sm:$0xff]
    %v111 = vld [vmem:[%s1 + $0x118] sm:$0xff]
    %v112 = vld [vmem:[%s1 + $0x120] sm:$0xff]
    %v113 = vld [vmem:[%s1 + $0x128] sm:$0xff]
    %v114 = vld [vmem:[%s1 + $0x130] sm:$0xff]
    %v115 = vld [vmem:[%s1 + $0x138] sm:$0xff]
    %v116 = vld [vmem:[%s1 + $0x140] sm:$0xff]
    %v117 = vld [vmem:[%s1 + $0x148] sm:$0xff]
    %v118 = vld [vmem:[%s1 + $0x150] sm:$0xff]
    %v119 = vld [vmem:[%s1 + $0x158] sm:$0xff]
    %v120 = vld [vmem:[%s1 + $0x160] sm:$0xff]
    %v121 = vld [vmem:[%s1 + $0x168] sm:$0xff]
    %v122 = vld [vmem:[%s1 + $0x170] sm:$0xff]
    %v123 = vld [vmem:[%s1 + $0x178] sm:$0xff]
    %v124 = vld [vmem:[%s1 + $0x180] sm:$0xff]
    %v125 = vld [vmem:[%s1 + $0x188] sm:$0xff]
    %v126 = vld [vmem:[%s1 + $0x190] sm:$0xff]
    %v127 = vld [vmem:[%s1 + $0x198] sm:$0xff]
    %v128 = vld [vmem:[%s1 + $0x1a0] sm:$0xff]
    %v129 = vld [vmem:[%s1 + $0x1a8] sm:$0xff]
    %v130 = vld [vmem:[%s1 + $0x1b0] sm:$0xff]
    %v131 = vld [vmem:[%s1 + $0x1b8] sm:$0xff]
    %v132 = vld [vmem:[%s1 + $0x1c0] sm:$0xff]
    %v133 = vld [vmem:[%s1 + $0x1c8] sm:$0xff]
    %v134 = vld [vmem:[%s1 + $0x1d0] sm:$0xff]
    %v135 = vld [vmem:[%s1 + $0x1d8] sm:$0xff]
    %v136 = vld [vmem:[%s1 + $0x1e0] sm:$0xff]
    %v137 = vld [vmem:[%s1 + $0x1e8] sm:$0xff]
    %v138 = vld [vmem:[%s1 + $0x1f0] sm:$0xff]
    %v139 = vld [vmem:[%s1 + $0x1f8] sm:$0xff]
    %vm140 = vcmask 31744
    %v141 = vsel %vm140, %v12, -inf
    %142 = vmax.xlane.f32.xlu0 %v141
    %v143 = vpop.xlane.xlu0 %142
    %v144 = vsel %vm140, %v13, -inf
    %145 = vmax.xlane.f32.xlu0 %v144
    %v146 = vpop.xlane.xlu0 %145
    %v147 = vsel %vm140, %v14, -inf
    %148 = vmax.xlane.f32.xlu0 %v147
    %v149 = vpop.xlane.xlu0 %148
    %v150 = vsel %vm140, %v15, -inf
    %151 = vmax.xlane.f32.xlu0 %v150
    %v152 = vpop.xlane.xlu0 %151
    %v153 = vsel %vm140, %v16, -inf
    %154 = vmax.xlane.f32.xlu0 %v153
    %v155 = vpop.xlane.xlu0 %154
    %v156 = vsel %vm140, %v17, -inf
    %157 = vmax.xlane.f32.xlu0 %v156
    %v158 = vpop.xlane.xlu0 %157
    %v159 = vsel %vm140, %v18, -inf
    %160 = vmax.xlane.f32.xlu0 %v159
    %v161 = vpop.xlane.xlu0 %160
    %v162 = vsel %vm140, %v19, -inf
    %163 = vmax.xlane.f32.xlu0 %v162
    %v164 = vpop.xlane.xlu0 %163
    %v165 = vsel %vm140, %v20, -inf
    %166 = vmax.xlane.f32.xlu0 %v165
    %v167 = vpop.xlane.xlu0 %166
    %v168 = vsel %vm140, %v21, -inf
    %169 = vmax.xlane.f32.xlu0 %v168
    %v170 = vpop.xlane.xlu0 %169
    %v171 = vsel %vm140, %v22, -inf
    %172 = vmax.xlane.f32.xlu0 %v171
    %v173 = vpop.xlane.xlu0 %172
    %v174 = vsel %vm140, %v23, -inf
    %175 = vmax.xlane.f32.xlu0 %v174
    %v176 = vpop.xlane.xlu0 %175
    %v177 = vsel %vm140, %v24, -inf
    %178 = vmax.xlane.f32.xlu0 %v177
    %v179 = vpop.xlane.xlu0 %178
    %v180 = vsel %vm140, %v25, -inf
    %181 = vmax.xlane.f32.xlu0 %v180
    %v182 = vpop.xlane.xlu0 %181
    %v183 = vsel %vm140, %v26, -inf
    %184 = vmax.xlane.f32.xlu0 %v183
    %v185 = vpop.xlane.xlu0 %184
    %v186 = vsel %vm140, %v27, -inf
    %187 = vmax.xlane.f32.xlu0 %v186
    %v188 = vpop.xlane.xlu0 %187
    %v189 = vsel %vm140, %v28, -inf
    %190 = vmax.xlane.f32.xlu0 %v189
    %v191 = vpop.xlane.xlu0 %190
    %v192 = vsel %vm140, %v29, -inf
    %193 = vmax.xlane.f32.xlu0 %v192
    %v194 = vpop.xlane.xlu0 %193
    %v195 = vsel %vm140, %v30, -inf
    %196 = vmax.xlane.f32.xlu0 %v195
    %v197 = vpop.xlane.xlu0 %196
    %v198 = vsel %vm140, %v31, -inf
    %199 = vmax.xlane.f32.xlu0 %v198
    %v200 = vpop.xlane.xlu0 %199
    %v201 = vsel %vm140, %v32, -inf
    %202 = vmax.xlane.f32.xlu0 %v201
    %v203 = vpop.xlane.xlu0 %202
    %v204 = vsel %vm140, %v33, -inf
    %205 = vmax.xlane.f32.xlu0 %v204
    %v206 = vpop.xlane.xlu0 %205
    %v207 = vsel %vm140, %v34, -inf
    %208 = vmax.xlane.f32.xlu0 %v207
    %v209 = vpop.xlane.xlu0 %208
    %v210 = vsel %vm140, %v35, -inf
    %211 = vmax.xlane.f32.xlu0 %v210
    %v212 = vpop.xlane.xlu0 %211
    %v213 = vsel %vm140, %v36, -inf
    %214 = vmax.xlane.f32.xlu0 %v213
    %v215 = vpop.xlane.xlu0 %214
    %v216 = vsel %vm140, %v37, -inf
    %217 = vmax.xlane.f32.xlu0 %v216
    %v218 = vpop.xlane.xlu0 %217
    %v219 = vsel %vm140, %v38, -inf
    %220 = vmax.xlane.f32.xlu0 %v219
    %v221 = vpop.xlane.xlu0 %220
    %v222 = vsel %vm140, %v39, -inf
    %223 = vmax.xlane.f32.xlu0 %v222
    %v224 = vpop.xlane.xlu0 %223
    %v225 = vsel %vm140, %v40, -inf
    %226 = vmax.xlane.f32.xlu0 %v225
    %v227 = vpop.xlane.xlu0 %226
    %v228 = vsel %vm140, %v41, -inf
    %229 = vmax.xlane.f32.xlu0 %v228
    %v230 = vpop.xlane.xlu0 %229
    %v231 = vsel %vm140, %v42, -inf
    %232 = vmax.xlane.f32.xlu0 %v231
    %v233 = vpop.xlane.xlu0 %232
    %v234 = vsel %vm140, %v43, -inf
    %235 = vmax.xlane.f32.xlu0 %v234
    %v236 = vpop.xlane.xlu0 %235
    %v237 = vsel %vm140, %v44, -inf
    %238 = vmax.xlane.f32.xlu0 %v237
    %v239 = vpop.xlane.xlu0 %238
    %v240 = vsel %vm140, %v45, -inf
    %241 = vmax.xlane.f32.xlu0 %v240
    %v242 = vpop.xlane.xlu0 %241
    %v243 = vsel %vm140, %v46, -inf
    %244 = vmax.xlane.f32.xlu0 %v243
    %v245 = vpop.xlane.xlu0 %244
    %v246 = vsel %vm140, %v47, -inf
    %247 = vmax.xlane.f32.xlu0 %v246
    %v248 = vpop.xlane.xlu0 %247
    %v249 = vsel %vm140, %v48, -inf
    %250 = vmax.xlane.f32.xlu0 %v249
    %v251 = vpop.xlane.xlu0 %250
    %v252 = vsel %vm140, %v49, -inf
    %253 = vmax.xlane.f32.xlu0 %v252
    %v254 = vpop.xlane.xlu0 %253
    %v255 = vsel %vm140, %v50, -inf
    %256 = vmax.xlane.f32.xlu0 %v255
    %v257 = vpop.xlane.xlu0 %256
    %v258 = vsel %vm140, %v51, -inf
    %259 = vmax.xlane.f32.xlu0 %v258
    %v260 = vpop.xlane.xlu0 %259
    %v261 = vsel %vm140, %v52, -inf
    %262 = vmax.xlane.f32.xlu0 %v261
    %v263 = vpop.xlane.xlu0 %262
    %v264 = vsel %vm140, %v53, -inf
    %265 = vmax.xlane.f32.xlu0 %v264
    %v266 = vpop.xlane.xlu0 %265
    %v267 = vsel %vm140, %v54, -inf
    %268 = vmax.xlane.f32.xlu0 %v267
    %v269 = vpop.xlane.xlu0 %268
    %v270 = vsel %vm140, %v55, -inf
    %271 = vmax.xlane.f32.xlu0 %v270
    %v272 = vpop.xlane.xlu0 %271
    %v273 = vsel %vm140, %v56, -inf
    %274 = vmax.xlane.f32.xlu0 %v273
    %v275 = vpop.xlane.xlu0 %274
    %v276 = vsel %vm140, %v57, -inf
    %277 = vmax.xlane.f32.xlu0 %v276
    %v278 = vpop.xlane.xlu0 %277
    %v279 = vsel %vm140, %v58, -inf
    %280 = vmax.xlane.f32.xlu0 %v279
    %v281 = vpop.xlane.xlu0 %280
    %v282 = vsel %vm140, %v59, -inf
    %283 = vmax.xlane.f32.xlu0 %v282
    %v284 = vpop.xlane.xlu0 %283
    %v285 = vsel %vm140, %v60, -inf
    %286 = vmax.xlane.f32.xlu0 %v285
    %v287 = vpop.xlane.xlu0 %286
    %v288 = vsel %vm140, %v61, -inf
    %289 = vmax.xlane.f32.xlu0 %v288
    %v290 = vpop.xlane.xlu0 %289
    %v291 = vsel %vm140, %v62, -inf
    %292 = vmax.xlane.f32.xlu0 %v291
    %v293 = vpop.xlane.xlu0 %292
    %v294 = vsel %vm140, %v63, -inf
    %295 = vmax.xlane.f32.xlu0 %v294
    %v296 = vpop.xlane.xlu0 %295
    %v297 = vsel %vm140, %v64, -inf
    %298 = vmax.xlane.f32.xlu0 %v297
    %v299 = vpop.xlane.xlu0 %298
    %v300 = vsel %vm140, %v65, -inf
    %301 = vmax.xlane.f32.xlu0 %v300
    %v302 = vpop.xlane.xlu0 %301
    %v303 = vsel %vm140, %v66, -inf
    %304 = vmax.xlane.f32.xlu0 %v303
    %v305 = vpop.xlane.xlu0 %304
    %v306 = vsel %vm140, %v67, -inf
    %307 = vmax.xlane.f32.xlu0 %v306
    %v308 = vpop.xlane.xlu0 %307
    %v309 = vsel %vm140, %v68, -inf
    %310 = vmax.xlane.f32.xlu0 %v309
    %v311 = vpop.xlane.xlu0 %310
    %v312 = vsel %vm140, %v69, -inf
    %313 = vmax.xlane.f32.xlu0 %v312
    %v314 = vpop.xlane.xlu0 %313
    %v315 = vsel %vm140, %v70, -inf
    %316 = vmax.xlane.f32.xlu0 %v315
    %v317 = vpop.xlane.xlu0 %316
    %v318 = vsel %vm140, %v71, -inf
    %319 = vmax.xlane.f32.xlu0 %v318
    %v320 = vpop.xlane.xlu0 %319
    %v321 = vsel %vm140, %v72, -inf
    %322 = vmax.xlane.f32.xlu0 %v321
    %v323 = vpop.xlane.xlu0 %322
    %v324 = vsel %vm140, %v73, -inf
    %325 = vmax.xlane.f32.xlu0 %v324
    %v326 = vpop.xlane.xlu0 %325
    %v327 = vsel %vm140, %v74, -inf
    %328 = vmax.xlane.f32.xlu0 %v327
    %v329 = vpop.xlane.xlu0 %328
    %v330 = vsel %vm140, %v75, -inf
    %331 = vmax.xlane.f32.xlu0 %v330
    %v332 = vpop.xlane.xlu0 %331
    %v333 = vsub.f32 %v12, %v143
    %v334 = vsub.f32 %v13, %v146
    %v335 = vsub.f32 %v14, %v149
    %v336 = vsub.f32 %v15, %v152
    %v337 = vsub.f32 %v16, %v155
    %v338 = vsub.f32 %v17, %v158
    %v339 = vsub.f32 %v18, %v161
    %v340 = vsub.f32 %v19, %v164
    %v341 = vsub.f32 %v20, %v167
    %v342 = vsub.f32 %v21, %v170
    %v343 = vsub.f32 %v22, %v173
    %v344 = vsub.f32 %v23, %v176
    %v345 = vsub.f32 %v24, %v179
    %v346 = vsub.f32 %v25, %v182
    %v347 = vsub.f32 %v26, %v185
    %v348 = vsub.f32 %v27, %v188
    %v349 = vsub.f32 %v28, %v191
    %v350 = vsub.f32 %v29, %v194
    %v351 = vsub.f32 %v30, %v197
    %v352 = vsub.f32 %v31, %v200
    %v353 = vsub.f32 %v32, %v203
    %v354 = vsub.f32 %v33, %v206
    %v355 = vsub.f32 %v34, %v209
    %v356 = vsub.f32 %v35, %v212
    %v357 = vsub.f32 %v36, %v215
    %v358 = vsub.f32 %v37, %v218
    %v359 = vsub.f32 %v38, %v221
    %v360 = vsub.f32 %v39, %v224
    %v361 = vsub.f32 %v40, %v227
    %v362 = vsub.f32 %v41, %v230
    %v363 = vsub.f32 %v42, %v233
    %v364 = vsub.f32 %v43, %v236
    %v365 = vsub.f32 %v44, %v239
    %v366 = vsub.f32 %v45, %v242
    %v367 = vsub.f32 %v46, %v245
    %v368 = vsub.f32 %v47, %v248
    %v369 = vsub.f32 %v48, %v251
    %v370 = vsub.f32 %v49, %v254
    %v371 = vsub.f32 %v50, %v257
    %v372 = vsub.f32 %v51, %v260
    %v373 = vsub.f32 %v52, %v263
    %v374 = vsub.f32 %v53, %v266
    %v375 = vsub.f32 %v54, %v269
    %v376 = vsub.f32 %v55, %v272
    %v377 = vsub.f32 %v56, %v275
    %v378 = vsub.f32 %v57, %v278
    %v379 = vsub.f32 %v58, %v281
    %v380 = vsub.f32 %v59, %v284
    %v381 = vsub.f32 %v60, %v287
    %v382 = vsub.f32 %v61, %v290
    %v383 = vsub.f32 %v62, %v293
    %v384 = vsub.f32 %v63, %v296
    %v385 = vsub.f32 %v64, %v299
    %v386 = vsub.f32 %v65, %v302
    %v387 = vsub.f32 %v66, %v305
    %v388 = vsub.f32 %v67, %v308
    %v389 = vsub.f32 %v68, %v311
    %v390 = vsub.f32 %v69, %v314
    %v391 = vsub.f32 %v70, %v317
    %v392 = vsub.f32 %v71, %v320
    %v393 = vsub.f32 %v72, %v323
    %v394 = vsub.f32 %v73, %v326
    %v395 = vsub.f32 %v74, %v329
    %v396 = vsub.f32 %v75, %v332
    %v397 = vmul.f32 %v333, 1.442695
    %v398 = vpow.pop %v397
    %v399 = vmul.f32 %v334, 1.442695
    %v400 = vpow.pop %v399
    %v401 = vmul.f32 %v335, 1.442695
    %v402 = vpow.pop %v401
    %v403 = vmul.f32 %v336, 1.442695
    %v404 = vpow.pop %v403
    %v405 = vmul.f32 %v337, 1.442695
    %v406 = vpow.pop %v405
    %v407 = vmul.f32 %v338, 1.442695
    %v408 = vpow.pop %v407
    %v409 = vmul.f32 %v339, 1.442695
    %v410 = vpow.pop %v409
    %v411 = vmul.f32 %v340, 1.442695
    %v412 = vpow.pop %v411
    %v413 = vmul.f32 %v341, 1.442695
    %v414 = vpow.pop %v413
    %v415 = vmul.f32 %v342, 1.442695
    %v416 = vpow.pop %v415
    %v417 = vmul.f32 %v343, 1.442695
    %v418 = vpow.pop %v417
    %v419 = vmul.f32 %v344, 1.442695
    %v420 = vpow.pop %v419
    %v421 = vmul.f32 %v345, 1.442695
    %v422 = vpow.pop %v421
    %v423 = vmul.f32 %v346, 1.442695
    %v424 = vpow.pop %v423
    %v425 = vmul.f32 %v347, 1.442695
    %v426 = vpow.pop %v425
    %v427 = vmul.f32 %v348, 1.442695
    %v428 = vpow.pop %v427
    %v429 = vmul.f32 %v349, 1.442695
    %v430 = vpow.pop %v429
    %v431 = vmul.f32 %v350, 1.442695
    %v432 = vpow.pop %v431
    %v433 = vmul.f32 %v351, 1.442695
    %v434 = vpow.pop %v433
    %v435 = vmul.f32 %v352, 1.442695
    %v436 = vpow.pop %v435
    %v437 = vmul.f32 %v353, 1.442695
    %v438 = vpow.pop %v437
    %v439 = vmul.f32 %v354, 1.442695
    %v440 = vpow.pop %v439
    %v441 = vmul.f32 %v355, 1.442695
    %v442 = vpow.pop %v441
    %v443 = vmul.f32 %v356, 1.442695
    %v444 = vpow.pop %v443
    %v445 = vmul.f32 %v357, 1.442695
    %v446 = vpow.pop %v445
    %v447 = vmul.f32 %v358, 1.442695
    %v448 = vpow.pop %v447
    %v449 = vmul.f32 %v359, 1.442695
    %v450 = vpow.pop %v449
    %v451 = vmul.f32 %v360, 1.442695
    %v452 = vpow.pop %v451
    %v453 = vmul.f32 %v361, 1.442695
    %v454 = vpow.pop %v453
    %v455 = vmul.f32 %v362, 1.442695
    %v456 = vpow.pop %v455
    %v457 = vmul.f32 %v363, 1.442695
    %v458 = vpow.pop %v457
    %v459 = vmul.f32 %v364, 1.442695
    %v460 = vpow.pop %v459
    %v461 = vmul.f32 %v365, 1.442695
    %v462 = vpow.pop %v461
    %v463 = vmul.f32 %v366, 1.442695
    %v464 = vpow.pop %v463
    %v465 = vmul.f32 %v367, 1.442695
    %v466 = vpow.pop %v465
    %v467 = vmul.f32 %v368, 1.442695
    %v468 = vpow.pop %v467
    %v469 = vmul.f32 %v369, 1.442695
    %v470 = vpow.pop %v469
    %v471 = vmul.f32 %v370, 1.442695
    %v472 = vpow.pop %v471
    %v473 = vmul.f32 %v371, 1.442695
    %v474 = vpow.pop %v473
    %v475 = vmul.f32 %v372, 1.442695
    %v476 = vpow.pop %v475
    %v477 = vmul.f32 %v373, 1.442695
    %v478 = vpow.pop %v477
    %v479 = vmul.f32 %v374, 1.442695
    %v480 = vpow.pop %v479
    %v481 = vmul.f32 %v375, 1.442695
    %v482 = vpow.pop %v481
    %v483 = vmul.f32 %v376, 1.442695
    %v484 = vpow.pop %v483
    %v485 = vmul.f32 %v377, 1.442695
    %v486 = vpow.pop %v485
    %v487 = vmul.f32 %v378, 1.442695
    %v488 = vpow.pop %v487
    %v489 = vmul.f32 %v379, 1.442695
    %v490 = vpow.pop %v489
    %v491 = vmul.f32 %v380, 1.442695
    %v492 = vpow.pop %v491
    %v493 = vmul.f32 %v381, 1.442695
    %v494 = vpow.pop %v493
    %v495 = vmul.f32 %v382, 1.442695
    %v496 = vpow.pop %v495
    %v497 = vmul.f32 %v383, 1.442695
    %v498 = vpow.pop %v497
    %v499 = vmul.f32 %v384, 1.442695
    %v500 = vpow.pop %v499
    %v501 = vmul.f32 %v385, 1.442695
    %v502 = vpow.pop %v501
    %v503 = vmul.f32 %v386, 1.442695
    %v504 = vpow.pop %v503
    %v505 = vmul.f32 %v387, 1.442695
    %v506 = vpow.pop %v505
    %v507 = vmul.f32 %v388, 1.442695
    %v508 = vpow.pop %v507
    %v509 = vmul.f32 %v389, 1.442695
    %v510 = vpow.pop %v509
    %v511 = vmul.f32 %v390, 1.442695
    %v512 = vpow.pop %v511
    %v513 = vmul.f32 %v391, 1.442695
    %v514 = vpow.pop %v513
    %v515 = vmul.f32 %v392, 1.442695
    %v516 = vpow.pop %v515
    %v517 = vmul.f32 %v393, 1.442695
    %v518 = vpow.pop %v517
    %v519 = vmul.f32 %v394, 1.442695
    %v520 = vpow.pop %v519
    %v521 = vmul.f32 %v395, 1.442695
    %v522 = vpow.pop %v521
    %v523 = vmul.f32 %v396, 1.442695
    %v524 = vpow.pop %v523
    %v525 = vsel %vm140, %v398, 0.0
    %526 = vadd.xlane.f32.xlu0 %v525
    %v527 = vpop.xlane.xlu0 %526
    %v528 = vsel %vm140, %v400, 0.0
    %529 = vadd.xlane.f32.xlu0 %v528
    %v530 = vpop.xlane.xlu0 %529
    %v531 = vsel %vm140, %v402, 0.0
    %532 = vadd.xlane.f32.xlu0 %v531
    %v533 = vpop.xlane.xlu0 %532
    %v534 = vsel %vm140, %v404, 0.0
    %535 = vadd.xlane.f32.xlu0 %v534
    %v536 = vpop.xlane.xlu0 %535
    %v537 = vsel %vm140, %v406, 0.0
    %538 = vadd.xlane.f32.xlu0 %v537
    %v539 = vpop.xlane.xlu0 %538
    %v540 = vsel %vm140, %v408, 0.0
    %541 = vadd.xlane.f32.xlu0 %v540
    %v542 = vpop.xlane.xlu0 %541
    %v543 = vsel %vm140, %v410, 0.0
    %544 = vadd.xlane.f32.xlu0 %v543
    %v545 = vpop.xlane.xlu0 %544
    %v546 = vsel %vm140, %v412, 0.0
    %547 = vadd.xlane.f32.xlu0 %v546
    %v548 = vpop.xlane.xlu0 %547
    %v549 = vsel %vm140, %v414, 0.0
    %550 = vadd.xlane.f32.xlu0 %v549
    %v551 = vpop.xlane.xlu0 %550
    %v552 = vsel %vm140, %v416, 0.0
    %553 = vadd.xlane.f32.xlu0 %v552
    %v554 = vpop.xlane.xlu0 %553
    %v555 = vsel %vm140, %v418, 0.0
    %556 = vadd.xlane.f32.xlu0 %v555
    %v557 = vpop.xlane.xlu0 %556
    %v558 = vsel %vm140, %v420, 0.0
    %559 = vadd.xlane.f32.xlu0 %v558
    %v560 = vpop.xlane.xlu0 %559
    %v561 = vsel %vm140, %v422, 0.0
    %562 = vadd.xlane.f32.xlu0 %v561
    %v563 = vpop.xlane.xlu0 %562
    %v564 = vsel %vm140, %v424, 0.0
    %565 = vadd.xlane.f32.xlu0 %v564
    %v566 = vpop.xlane.xlu0 %565
    %v567 = vsel %vm140, %v426, 0.0
    %568 = vadd.xlane.f32.xlu0 %v567
    %v569 = vpop.xlane.xlu0 %568
    %v570 = vsel %vm140, %v428, 0.0
    %571 = vadd.xlane.f32.xlu0 %v570
    %v572 = vpop.xlane.xlu0 %571
    %v573 = vsel %vm140, %v430, 0.0
    %574 = vadd.xlane.f32.xlu0 %v573
    %v575 = vpop.xlane.xlu0 %574
    %v576 = vsel %vm140, %v432, 0.0
    %577 = vadd.xlane.f32.xlu0 %v576
    %v578 = vpop.xlane.xlu0 %577
    %v579 = vsel %vm140, %v434, 0.0
    %580 = vadd.xlane.f32.xlu0 %v579
    %v581 = vpop.xlane.xlu0 %580
    %v582 = vsel %vm140, %v436, 0.0
    %583 = vadd.xlane.f32.xlu0 %v582
    %v584 = vpop.xlane.xlu0 %583
    %v585 = vsel %vm140, %v438, 0.0
    %586 = vadd.xlane.f32.xlu0 %v585
    %v587 = vpop.xlane.xlu0 %586
    %v588 = vsel %vm140, %v440, 0.0
    %589 = vadd.xlane.f32.xlu0 %v588
    %v590 = vpop.xlane.xlu0 %589
    %v591 = vsel %vm140, %v442, 0.0
    %592 = vadd.xlane.f32.xlu0 %v591
    %v593 = vpop.xlane.xlu0 %592
    %v594 = vsel %vm140, %v444, 0.0
    %595 = vadd.xlane.f32.xlu0 %v594
    %v596 = vpop.xlane.xlu0 %595
    %v597 = vsel %vm140, %v446, 0.0
    %598 = vadd.xlane.f32.xlu0 %v597
    %v599 = vpop.xlane.xlu0 %598
    %v600 = vsel %vm140, %v448, 0.0
    %601 = vadd.xlane.f32.xlu0 %v600
    %v602 = vpop.xlane.xlu0 %601
    %v603 = vsel %vm140, %v450, 0.0
    %604 = vadd.xlane.f32.xlu0 %v603
    %v605 = vpop.xlane.xlu0 %604
    %v606 = vsel %vm140, %v452, 0.0
    %607 = vadd.xlane.f32.xlu0 %v606
    %v608 = vpop.xlane.xlu0 %607
    %v609 = vsel %vm140, %v454, 0.0
    %610 = vadd.xlane.f32.xlu0 %v609
    %v611 = vpop.xlane.xlu0 %610
    %v612 = vsel %vm140, %v456, 0.0
    %613 = vadd.xlane.f32.xlu0 %v612
    %v614 = vpop.xlane.xlu0 %613
    %v615 = vsel %vm140, %v458, 0.0
    %616 = vadd.xlane.f32.xlu0 %v615
    %v617 = vpop.xlane.xlu0 %616
    %v618 = vsel %vm140, %v460, 0.0
    %619 = vadd.xlane.f32.xlu0 %v618
    %v620 = vpop.xlane.xlu0 %619
    %v621 = vsel %vm140, %v462, 0.0
    %622 = vadd.xlane.f32.xlu0 %v621
    %v623 = vpop.xlane.xlu0 %622
    %v624 = vsel %vm140, %v464, 0.0
    %625 = vadd.xlane.f32.xlu0 %v624
    %v626 = vpop.xlane.xlu0 %625
    %v627 = vsel %vm140, %v466, 0.0
    %628 = vadd.xlane.f32.xlu0 %v627
    %v629 = vpop.xlane.xlu0 %628
    %v630 = vsel %vm140, %v468, 0.0
    %631 = vadd.xlane.f32.xlu0 %v630
    %v632 = vpop.xlane.xlu0 %631
    %v633 = vsel %vm140, %v470, 0.0
    %634 = vadd.xlane.f32.xlu0 %v633
    %v635 = vpop.xlane.xlu0 %634
    %v636 = vsel %vm140, %v472, 0.0
    %637 = vadd.xlane.f32.xlu0 %v636
    %v638 = vpop.xlane.xlu0 %637
    %v639 = vsel %vm140, %v474, 0.0
    %640 = vadd.xlane.f32.xlu0 %v639
    %v641 = vpop.xlane.xlu0 %640
    %v642 = vsel %vm140, %v476, 0.0
    %643 = vadd.xlane.f32.xlu0 %v642
    %v644 = vpop.xlane.xlu0 %643
    %v645 = vsel %vm140, %v478, 0.0
    %646 = vadd.xlane.f32.xlu0 %v645
    %v647 = vpop.xlane.xlu0 %646
    %v648 = vsel %vm140, %v480, 0.0
    %649 = vadd.xlane.f32.xlu0 %v648
    %v650 = vpop.xlane.xlu0 %649
    %v651 = vsel %vm140, %v482, 0.0
    %652 = vadd.xlane.f32.xlu0 %v651
    %v653 = vpop.xlane.xlu0 %652
    %v654 = vsel %vm140, %v484, 0.0
    %655 = vadd.xlane.f32.xlu0 %v654
    %v656 = vpop.xlane.xlu0 %655
    %v657 = vsel %vm140, %v486, 0.0
    %658 = vadd.xlane.f32.xlu0 %v657
    %v659 = vpop.xlane.xlu0 %658
    %v660 = vsel %vm140, %v488, 0.0
    %661 = vadd.xlane.f32.xlu0 %v660
    %v662 = vpop.xlane.xlu0 %661
    %v663 = vsel %vm140, %v490, 0.0
    %664 = vadd.xlane.f32.xlu0 %v663
    %v665 = vpop.xlane.xlu0 %664
    %v666 = vsel %vm140, %v492, 0.0
    %667 = vadd.xlane.f32.xlu0 %v666
    %v668 = vpop.xlane.xlu0 %667
    %v669 = vsel %vm140, %v494, 0.0
    %670 = vadd.xlane.f32.xlu0 %v669
    %v671 = vpop.xlane.xlu0 %670
    %v672 = vsel %vm140, %v496, 0.0
    %673 = vadd.xlane.f32.xlu0 %v672
    %v674 = vpop.xlane.xlu0 %673
    %v675 = vsel %vm140, %v498, 0.0
    %676 = vadd.xlane.f32.xlu0 %v675
    %v677 = vpop.xlane.xlu0 %676
    %v678 = vsel %vm140, %v500, 0.0
    %679 = vadd.xlane.f32.xlu0 %v678
    %v680 = vpop.xlane.xlu0 %679
    %v681 = vsel %vm140, %v502, 0.0
    %682 = vadd.xlane.f32.xlu0 %v681
    %v683 = vpop.xlane.xlu0 %682
    %v684 = vsel %vm140, %v504, 0.0
    %685 = vadd.xlane.f32.xlu0 %v684
    %v686 = vpop.xlane.xlu0 %685
    %v687 = vsel %vm140, %v506, 0.0
    %688 = vadd.xlane.f32.xlu0 %v687
    %v689 = vpop.xlane.xlu0 %688
    %v690 = vsel %vm140, %v508, 0.0
    %691 = vadd.xlane.f32.xlu0 %v690
    %v692 = vpop.xlane.xlu0 %691
    %v693 = vsel %vm140, %v510, 0.0
    %694 = vadd.xlane.f32.xlu0 %v693
    %v695 = vpop.xlane.xlu0 %694
    %v696 = vsel %vm140, %v512, 0.0
    %697 = vadd.xlane.f32.xlu0 %v696
    %v698 = vpop.xlane.xlu0 %697
    %v699 = vsel %vm140, %v514, 0.0
    %700 = vadd.xlane.f32.xlu0 %v699
    %v701 = vpop.xlane.xlu0 %700
    %v702 = vsel %vm140, %v516, 0.0
    %703 = vadd.xlane.f32.xlu0 %v702
    %v704 = vpop.xlane.xlu0 %703
    %v705 = vsel %vm140, %v518, 0.0
    %706 = vadd.xlane.f32.xlu0 %v705
    %v707 = vpop.xlane.xlu0 %706
    %v708 = vsel %vm140, %v520, 0.0
    %709 = vadd.xlane.f32.xlu0 %v708
    %v710 = vpop.xlane.xlu0 %709
    %v711 = vsel %vm140, %v522, 0.0
    %712 = vadd.xlane.f32.xlu0 %v711
    %v713 = vpop.xlane.xlu0 %712
    %v714 = vsel %vm140, %v524, 0.0
    %715 = vadd.xlane.f32.xlu0 %v714
    %v716 = vpop.xlane.xlu0 %715
    %v717 = vlog2.pop %v527
    %v718 = vmul.f32 %v717, 0.6931472
    %v719 = vlog2.pop %v530
    %v720 = vmul.f32 %v719, 0.6931472
    %v721 = vlog2.pop %v533
    %v722 = vmul.f32 %v721, 0.6931472
    %v723 = vlog2.pop %v536
    %v724 = vmul.f32 %v723, 0.6931472
    %v725 = vlog2.pop %v539
    %v726 = vmul.f32 %v725, 0.6931472
    %v727 = vlog2.pop %v542
    %v728 = vmul.f32 %v727, 0.6931472
    %v729 = vlog2.pop %v545
    %v730 = vmul.f32 %v729, 0.6931472
    %v731 = vlog2.pop %v548
    %v732 = vmul.f32 %v731, 0.6931472
    %v733 = vlog2.pop %v551
    %v734 = vmul.f32 %v733, 0.6931472
    %v735 = vlog2.pop %v554
    %v736 = vmul.f32 %v735, 0.6931472
    %v737 = vlog2.pop %v557
    %v738 = vmul.f32 %v737, 0.6931472
    %v739 = vlog2.pop %v560
    %v740 = vmul.f32 %v739, 0.6931472
    %v741 = vlog2.pop %v563
    %v742 = vmul.f32 %v741, 0.6931472
    %v743 = vlog2.pop %v566
    %v744 = vmul.f32 %v743, 0.6931472
    %v745 = vlog2.pop %v569
    %v746 = vmul.f32 %v745, 0.6931472
    %v747 = vlog2.pop %v572
    %v748 = vmul.f32 %v747, 0.6931472
    %v749 = vlog2.pop %v575
    %v750 = vmul.f32 %v749, 0.6931472
    %v751 = vlog2.pop %v578
    %v752 = vmul.f32 %v751, 0.6931472
    %v753 = vlog2.pop %v581
    %v754 = vmul.f32 %v753, 0.6931472
    %v755 = vlog2.pop %v584
    %v756 = vmul.f32 %v755, 0.6931472
    %v757 = vlog2.pop %v587
    %v758 = vmul.f32 %v757, 0.6931472
    %v759 = vlog2.pop %v590
    %v760 = vmul.f32 %v759, 0.6931472
    %v761 = vlog2.pop %v593
    %v762 = vmul.f32 %v761, 0.6931472
    %v763 = vlog2.pop %v596
    %v764 = vmul.f32 %v763, 0.6931472
    %v765 = vlog2.pop %v599
    %v766 = vmul.f32 %v765, 0.6931472
    %v767 = vlog2.pop %v602
    %v768 = vmul.f32 %v767, 0.6931472
    %v769 = vlog2.pop %v605
    %v770 = vmul.f32 %v769, 0.6931472
    %v771 = vlog2.pop %v608
    %v772 = vmul.f32 %v771, 0.6931472
    %v773 = vlog2.pop %v611
    %v774 = vmul.f32 %v773, 0.6931472
    %v775 = vlog2.pop %v614
    %v776 = vmul.f32 %v775, 0.6931472
    %v777 = vlog2.pop %v617
    %v778 = vmul.f32 %v777, 0.6931472
    %v779 = vlog2.pop %v620
    %v780 = vmul.f32 %v779, 0.6931472
    %v781 = vlog2.pop %v623
    %v782 = vmul.f32 %v781, 0.6931472
    %v783 = vlog2.pop %v626
    %v784 = vmul.f32 %v783, 0.6931472
    %v785 = vlog2.pop %v629
    %v786 = vmul.f32 %v785, 0.6931472
    %v787 = vlog2.pop %v632
    %v788 = vmul.f32 %v787, 0.6931472
    %v789 = vlog2.pop %v635
    %v790 = vmul.f32 %v789, 0.6931472
    %v791 = vlog2.pop %v638
    %v792 = vmul.f32 %v791, 0.6931472
    %v793 = vlog2.pop %v641
    %v794 = vmul.f32 %v793, 0.6931472
    %v795 = vlog2.pop %v644
    %v796 = vmul.f32 %v795, 0.6931472
    %v797 = vlog2.pop %v647
    %v798 = vmul.f32 %v797, 0.6931472
    %v799 = vlog2.pop %v650
    %v800 = vmul.f32 %v799, 0.6931472
    %v801 = vlog2.pop %v653
    %v802 = vmul.f32 %v801, 0.6931472
    %v803 = vlog2.pop %v656
    %v804 = vmul.f32 %v803, 0.6931472
    %v805 = vlog2.pop %v659
    %v806 = vmul.f32 %v805, 0.6931472
    %v807 = vlog2.pop %v662
    %v808 = vmul.f32 %v807, 0.6931472
    %v809 = vlog2.pop %v665
    %v810 = vmul.f32 %v809, 0.6931472
    %v811 = vlog2.pop %v668
    %v812 = vmul.f32 %v811, 0.6931472
    %v813 = vlog2.pop %v671
    %v814 = vmul.f32 %v813, 0.6931472
    %v815 = vlog2.pop %v674
    %v816 = vmul.f32 %v815, 0.6931472
    %v817 = vlog2.pop %v677
    %v818 = vmul.f32 %v817, 0.6931472
    %v819 = vlog2.pop %v680
    %v820 = vmul.f32 %v819, 0.6931472
    %v821 = vlog2.pop %v683
    %v822 = vmul.f32 %v821, 0.6931472
    %v823 = vlog2.pop %v686
    %v824 = vmul.f32 %v823, 0.6931472
    %v825 = vlog2.pop %v689
    %v826 = vmul.f32 %v825, 0.6931472
    %v827 = vlog2.pop %v692
    %v828 = vmul.f32 %v827, 0.6931472
    %v829 = vlog2.pop %v695
    %v830 = vmul.f32 %v829, 0.6931472
    %v831 = vlog2.pop %v698
    %v832 = vmul.f32 %v831, 0.6931472
    %v833 = vlog2.pop %v701
    %v834 = vmul.f32 %v833, 0.6931472
    %v835 = vlog2.pop %v704
    %v836 = vmul.f32 %v835, 0.6931472
    %v837 = vlog2.pop %v707
    %v838 = vmul.f32 %v837, 0.6931472
    %v839 = vlog2.pop %v710
    %v840 = vmul.f32 %v839, 0.6931472
    %v841 = vlog2.pop %v713
    %v842 = vmul.f32 %v841, 0.6931472
    %v843 = vlog2.pop %v716
    %v844 = vmul.f32 %v843, 0.6931472
    %v845 = vadd.f32 %v143, %v718
    %v846 = vadd.f32 %v146, %v720
    %v847 = vadd.f32 %v149, %v722
    %v848 = vadd.f32 %v152, %v724
    %v849 = vadd.f32 %v155, %v726
    %v850 = vadd.f32 %v158, %v728
    %v851 = vadd.f32 %v161, %v730
    %v852 = vadd.f32 %v164, %v732
    %v853 = vadd.f32 %v167, %v734
    %v854 = vadd.f32 %v170, %v736
    %v855 = vadd.f32 %v173, %v738
    %v856 = vadd.f32 %v176, %v740
    %v857 = vadd.f32 %v179, %v742
    %v858 = vadd.f32 %v182, %v744
    %v859 = vadd.f32 %v185, %v746
    %v860 = vadd.f32 %v188, %v748
    %v861 = vadd.f32 %v191, %v750
    %v862 = vadd.f32 %v194, %v752
    %v863 = vadd.f32 %v197, %v754
    %v864 = vadd.f32 %v200, %v756
    %v865 = vadd.f32 %v203, %v758
    %v866 = vadd.f32 %v206, %v760
    %v867 = vadd.f32 %v209, %v762
    %v868 = vadd.f32 %v212, %v764
    %v869 = vadd.f32 %v215, %v766
    %v870 = vadd.f32 %v218, %v768
    %v871 = vadd.f32 %v221, %v770
    %v872 = vadd.f32 %v224, %v772
    %v873 = vadd.f32 %v227, %v774
    %v874 = vadd.f32 %v230, %v776
    %v875 = vadd.f32 %v233, %v778
    %v876 = vadd.f32 %v236, %v780
    %v877 = vadd.f32 %v239, %v782
    %v878 = vadd.f32 %v242, %v784
    %v879 = vadd.f32 %v245, %v786
    %v880 = vadd.f32 %v248, %v788
    %v881 = vadd.f32 %v251, %v790
    %v882 = vadd.f32 %v254, %v792
    %v883 = vadd.f32 %v257, %v794
    %v884 = vadd.f32 %v260, %v796
    %v885 = vadd.f32 %v263, %v798
    %v886 = vadd.f32 %v266, %v800
    %v887 = vadd.f32 %v269, %v802
    %v888 = vadd.f32 %v272, %v804
    %v889 = vadd.f32 %v275, %v806
    %v890 = vadd.f32 %v278, %v808
    %v891 = vadd.f32 %v281, %v810
    %v892 = vadd.f32 %v284, %v812
    %v893 = vadd.f32 %v287, %v814
    %v894 = vadd.f32 %v290, %v816
    %v895 = vadd.f32 %v293, %v818
    %v896 = vadd.f32 %v296, %v820
    %v897 = vadd.f32 %v299, %v822
    %v898 = vadd.f32 %v302, %v824
    %v899 = vadd.f32 %v305, %v826
    %v900 = vadd.f32 %v308, %v828
    %v901 = vadd.f32 %v311, %v830
    %v902 = vadd.f32 %v314, %v832
    %v903 = vadd.f32 %v317, %v834
    %v904 = vadd.f32 %v320, %v836
    %v905 = vadd.f32 %v323, %v838
    %v906 = vadd.f32 %v326, %v840
    %v907 = vadd.f32 %v329, %v842
    %v908 = vadd.f32 %v332, %v844
    %v909 = vlaneseq
    %v910 = vand.u32 %v909, 127
    %911 = vset.pattern.permute.xlu0 0
    %912 = vperm.xlu0 %911, %v76
    %v913 = vpop.permute.xlu0 %912
    %914 = vset.pattern.permute.xlu0 0
    %915 = vperm.xlu0 %914, %v77
    %v916 = vpop.permute.xlu0 %915
    %917 = vset.pattern.permute.xlu0 0
    %918 = vperm.xlu0 %917, %v78
    %v919 = vpop.permute.xlu0 %918
    %920 = vset.pattern.permute.xlu0 0
    %921 = vperm.xlu0 %920, %v79
    %v922 = vpop.permute.xlu0 %921
    %923 = vset.pattern.permute.xlu0 0
    %924 = vperm.xlu0 %923, %v80
    %v925 = vpop.permute.xlu0 %924
    %926 = vset.pattern.permute.xlu0 0
    %927 = vperm.xlu0 %926, %v81
    %v928 = vpop.permute.xlu0 %927
    %929 = vset.pattern.permute.xlu0 0
    %930 = vperm.xlu0 %929, %v82
    %v931 = vpop.permute.xlu0 %930
    %932 = vset.pattern.permute.xlu0 0
    %933 = vperm.xlu0 %932, %v83
    %v934 = vpop.permute.xlu0 %933
    %935 = vset.pattern.permute.xlu0 0
    %936 = vperm.xlu0 %935, %v84
    %v937 = vpop.permute.xlu0 %936
    %938 = vset.pattern.permute.xlu0 0
    %939 = vperm.xlu0 %938, %v85
    %v940 = vpop.permute.xlu0 %939
    %941 = vset.pattern.permute.xlu0 0
    %942 = vperm.xlu0 %941, %v86
    %v943 = vpop.permute.xlu0 %942
    %944 = vset.pattern.permute.xlu0 0
    %945 = vperm.xlu0 %944, %v87
    %v946 = vpop.permute.xlu0 %945
    %947 = vset.pattern.permute.xlu0 0
    %948 = vperm.xlu0 %947, %v88
    %v949 = vpop.permute.xlu0 %948
    %950 = vset.pattern.permute.xlu0 0
    %951 = vperm.xlu0 %950, %v89
    %v952 = vpop.permute.xlu0 %951
    %953 = vset.pattern.permute.xlu0 0
    %954 = vperm.xlu0 %953, %v90
    %v955 = vpop.permute.xlu0 %954
    %956 = vset.pattern.permute.xlu0 0
    %957 = vperm.xlu0 %956, %v91
    %v958 = vpop.permute.xlu0 %957
    %959 = vset.pattern.permute.xlu0 0
    %960 = vperm.xlu0 %959, %v92
    %v961 = vpop.permute.xlu0 %960
    %962 = vset.pattern.permute.xlu0 0
    %963 = vperm.xlu0 %962, %v93
    %v964 = vpop.permute.xlu0 %963
    %965 = vset.pattern.permute.xlu0 0
    %966 = vperm.xlu0 %965, %v94
    %v967 = vpop.permute.xlu0 %966
    %968 = vset.pattern.permute.xlu0 0
    %969 = vperm.xlu0 %968, %v95
    %v970 = vpop.permute.xlu0 %969
    %971 = vset.pattern.permute.xlu0 0
    %972 = vperm.xlu0 %971, %v96
    %v973 = vpop.permute.xlu0 %972
    %974 = vset.pattern.permute.xlu0 0
    %975 = vperm.xlu0 %974, %v97
    %v976 = vpop.permute.xlu0 %975
    %977 = vset.pattern.permute.xlu0 0
    %978 = vperm.xlu0 %977, %v98
    %v979 = vpop.permute.xlu0 %978
    %980 = vset.pattern.permute.xlu0 0
    %981 = vperm.xlu0 %980, %v99
    %v982 = vpop.permute.xlu0 %981
    %983 = vset.pattern.permute.xlu0 0
    %984 = vperm.xlu0 %983, %v100
    %v985 = vpop.permute.xlu0 %984
    %986 = vset.pattern.permute.xlu0 0
    %987 = vperm.xlu0 %986, %v101
    %v988 = vpop.permute.xlu0 %987
    %989 = vset.pattern.permute.xlu0 0
    %990 = vperm.xlu0 %989, %v102
    %v991 = vpop.permute.xlu0 %990
    %992 = vset.pattern.permute.xlu0 0
    %993 = vperm.xlu0 %992, %v103
    %v994 = vpop.permute.xlu0 %993
    %995 = vset.pattern.permute.xlu0 0
    %996 = vperm.xlu0 %995, %v104
    %v997 = vpop.permute.xlu0 %996
    %998 = vset.pattern.permute.xlu0 0
    %999 = vperm.xlu0 %998, %v105
    %v1000 = vpop.permute.xlu0 %999
    %1001 = vset.pattern.permute.xlu0 0
    %1002 = vperm.xlu0 %1001, %v106
    %v1003 = vpop.permute.xlu0 %1002
    %1004 = vset.pattern.permute.xlu0 0
    %1005 = vperm.xlu0 %1004, %v107
    %v1006 = vpop.permute.xlu0 %1005
    %1007 = vset.pattern.permute.xlu0 0
    %1008 = vperm.xlu0 %1007, %v108
    %v1009 = vpop.permute.xlu0 %1008
    %1010 = vset.pattern.permute.xlu0 0
    %1011 = vperm.xlu0 %1010, %v109
    %v1012 = vpop.permute.xlu0 %1011
    %1013 = vset.pattern.permute.xlu0 0
    %1014 = vperm.xlu0 %1013, %v110
    %v1015 = vpop.permute.xlu0 %1014
    %1016 = vset.pattern.permute.xlu0 0
    %1017 = vperm.xlu0 %1016, %v111
    %v1018 = vpop.permute.xlu0 %1017
    %1019 = vset.pattern.permute.xlu0 0
    %1020 = vperm.xlu0 %1019, %v112
    %v1021 = vpop.permute.xlu0 %1020
    %1022 = vset.pattern.permute.xlu0 0
    %1023 = vperm.xlu0 %1022, %v113
    %v1024 = vpop.permute.xlu0 %1023
    %1025 = vset.pattern.permute.xlu0 0
    %1026 = vperm.xlu0 %1025, %v114
    %v1027 = vpop.permute.xlu0 %1026
    %1028 = vset.pattern.permute.xlu0 0
    %1029 = vperm.xlu0 %1028, %v115
    %v1030 = vpop.permute.xlu0 %1029
    %1031 = vset.pattern.permute.xlu0 0
    %1032 = vperm.xlu0 %1031, %v116
    %v1033 = vpop.permute.xlu0 %1032
    %1034 = vset.pattern.permute.xlu0 0
    %1035 = vperm.xlu0 %1034, %v117
    %v1036 = vpop.permute.xlu0 %1035
    %1037 = vset.pattern.permute.xlu0 0
    %1038 = vperm.xlu0 %1037, %v118
    %v1039 = vpop.permute.xlu0 %1038
    %1040 = vset.pattern.permute.xlu0 0
    %1041 = vperm.xlu0 %1040, %v119
    %v1042 = vpop.permute.xlu0 %1041
    %1043 = vset.pattern.permute.xlu0 0
    %1044 = vperm.xlu0 %1043, %v120
    %v1045 = vpop.permute.xlu0 %1044
    %1046 = vset.pattern.permute.xlu0 0
    %1047 = vperm.xlu0 %1046, %v121
    %v1048 = vpop.permute.xlu0 %1047
    %1049 = vset.pattern.permute.xlu0 0
    %1050 = vperm.xlu0 %1049, %v122
    %v1051 = vpop.permute.xlu0 %1050
    %1052 = vset.pattern.permute.xlu0 0
    %1053 = vperm.xlu0 %1052, %v123
    %v1054 = vpop.permute.xlu0 %1053
    %1055 = vset.pattern.permute.xlu0 0
    %1056 = vperm.xlu0 %1055, %v124
    %v1057 = vpop.permute.xlu0 %1056
    %1058 = vset.pattern.permute.xlu0 0
    %1059 = vperm.xlu0 %1058, %v125
    %v1060 = vpop.permute.xlu0 %1059
    %1061 = vset.pattern.permute.xlu0 0
    %1062 = vperm.xlu0 %1061, %v126
    %v1063 = vpop.permute.xlu0 %1062
    %1064 = vset.pattern.permute.xlu0 0
    %1065 = vperm.xlu0 %1064, %v127
    %v1066 = vpop.permute.xlu0 %1065
    %1067 = vset.pattern.permute.xlu0 0
    %1068 = vperm.xlu0 %1067, %v128
    %v1069 = vpop.permute.xlu0 %1068
    %1070 = vset.pattern.permute.xlu0 0
    %1071 = vperm.xlu0 %1070, %v129
    %v1072 = vpop.permute.xlu0 %1071
    %1073 = vset.pattern.permute.xlu0 0
    %1074 = vperm.xlu0 %1073, %v130
    %v1075 = vpop.permute.xlu0 %1074
    %1076 = vset.pattern.permute.xlu0 0
    %1077 = vperm.xlu0 %1076, %v131
    %v1078 = vpop.permute.xlu0 %1077
    %1079 = vset.pattern.permute.xlu0 0
    %1080 = vperm.xlu0 %1079, %v132
    %v1081 = vpop.permute.xlu0 %1080
    %1082 = vset.pattern.permute.xlu0 0
    %1083 = vperm.xlu0 %1082, %v133
    %v1084 = vpop.permute.xlu0 %1083
    %1085 = vset.pattern.permute.xlu0 0
    %1086 = vperm.xlu0 %1085, %v134
    %v1087 = vpop.permute.xlu0 %1086
    %1088 = vset.pattern.permute.xlu0 0
    %1089 = vperm.xlu0 %1088, %v135
    %v1090 = vpop.permute.xlu0 %1089
    %1091 = vset.pattern.permute.xlu0 0
    %1092 = vperm.xlu0 %1091, %v136
    %v1093 = vpop.permute.xlu0 %1092
    %1094 = vset.pattern.permute.xlu0 0
    %1095 = vperm.xlu0 %1094, %v137
    %v1096 = vpop.permute.xlu0 %1095
    %1097 = vset.pattern.permute.xlu0 0
    %1098 = vperm.xlu0 %1097, %v138
    %v1099 = vpop.permute.xlu0 %1098
    %1100 = vset.pattern.permute.xlu0 0
    %1101 = vperm.xlu0 %1100, %v139
    %v1102 = vpop.permute.xlu0 %1101
    %vm1103 = vcmp.eq.s32.totalorder %v910, %v913
    %vm1104 = vcmp.eq.s32.totalorder %v910, %v916
    %vm1105 = vcmp.eq.s32.totalorder %v910, %v919
    %vm1106 = vcmp.eq.s32.totalorder %v910, %v922
    %vm1107 = vcmp.eq.s32.totalorder %v910, %v925
    %vm1108 = vcmp.eq.s32.totalorder %v910, %v928
    %vm1109 = vcmp.eq.s32.totalorder %v910, %v931
    %vm1110 = vcmp.eq.s32.totalorder %v910, %v934
    %vm1111 = vcmp.eq.s32.totalorder %v910, %v937
    %vm1112 = vcmp.eq.s32.totalorder %v910, %v940
    %vm1113 = vcmp.eq.s32.totalorder %v910, %v943
    %vm1114 = vcmp.eq.s32.totalorder %v910, %v946
    %vm1115 = vcmp.eq.s32.totalorder %v910, %v949
    %vm1116 = vcmp.eq.s32.totalorder %v910, %v952
    %vm1117 = vcmp.eq.s32.totalorder %v910, %v955
    %vm1118 = vcmp.eq.s32.totalorder %v910, %v958
    %vm1119 = vcmp.eq.s32.totalorder %v910, %v961
    %vm1120 = vcmp.eq.s32.totalorder %v910, %v964
    %vm1121 = vcmp.eq.s32.totalorder %v910, %v967
    %vm1122 = vcmp.eq.s32.totalorder %v910, %v970
    %vm1123 = vcmp.eq.s32.totalorder %v910, %v973
    %vm1124 = vcmp.eq.s32.totalorder %v910, %v976
    %vm1125 = vcmp.eq.s32.totalorder %v910, %v979
    %vm1126 = vcmp.eq.s32.totalorder %v910, %v982
    %vm1127 = vcmp.eq.s32.totalorder %v910, %v985
    %vm1128 = vcmp.eq.s32.totalorder %v910, %v988
    %vm1129 = vcmp.eq.s32.totalorder %v910, %v991
    %vm1130 = vcmp.eq.s32.totalorder %v910, %v994
    %vm1131 = vcmp.eq.s32.totalorder %v910, %v997
    %vm1132 = vcmp.eq.s32.totalorder %v910, %v1000
    %vm1133 = vcmp.eq.s32.totalorder %v910, %v1003
    %vm1134 = vcmp.eq.s32.totalorder %v910, %v1006
    %vm1135 = vcmp.eq.s32.totalorder %v910, %v1009
    %vm1136 = vcmp.eq.s32.totalorder %v910, %v1012
    %vm1137 = vcmp.eq.s32.totalorder %v910, %v1015
    %vm1138 = vcmp.eq.s32.totalorder %v910, %v1018
    %vm1139 = vcmp.eq.s32.totalorder %v910, %v1021
    %vm1140 = vcmp.eq.s32.totalorder %v910, %v1024
    %vm1141 = vcmp.eq.s32.totalorder %v910, %v1027
    %vm1142 = vcmp.eq.s32.totalorder %v910, %v1030
    %vm1143 = vcmp.eq.s32.totalorder %v910, %v1033
    %vm1144 = vcmp.eq.s32.totalorder %v910, %v1036
    %vm1145 = vcmp.eq.s32.totalorder %v910, %v1039
    %vm1146 = vcmp.eq.s32.totalorder %v910, %v1042
    %vm1147 = vcmp.eq.s32.totalorder %v910, %v1045
    %vm1148 = vcmp.eq.s32.totalorder %v910, %v1048
    %vm1149 = vcmp.eq.s32.totalorder %v910, %v1051
    %vm1150 = vcmp.eq.s32.totalorder %v910, %v1054
    %vm1151 = vcmp.eq.s32.totalorder %v910, %v1057
    %vm1152 = vcmp.eq.s32.totalorder %v910, %v1060
    %vm1153 = vcmp.eq.s32.totalorder %v910, %v1063
    %vm1154 = vcmp.eq.s32.totalorder %v910, %v1066
    %vm1155 = vcmp.eq.s32.totalorder %v910, %v1069
    %vm1156 = vcmp.eq.s32.totalorder %v910, %v1072
    %vm1157 = vcmp.eq.s32.totalorder %v910, %v1075
    %vm1158 = vcmp.eq.s32.totalorder %v910, %v1078
    %vm1159 = vcmp.eq.s32.totalorder %v910, %v1081
    %vm1160 = vcmp.eq.s32.totalorder %v910, %v1084
    %vm1161 = vcmp.eq.s32.totalorder %v910, %v1087
    %vm1162 = vcmp.eq.s32.totalorder %v910, %v1090
    %vm1163 = vcmp.eq.s32.totalorder %v910, %v1093
    %vm1164 = vcmp.eq.s32.totalorder %v910, %v1096
    %vm1165 = vcmp.eq.s32.totalorder %v910, %v1099
    %vm1166 = vcmp.eq.s32.totalorder %v910, %v1102
    %v1167 = vsel %vm1103, %v12, 0.0
    %v1168 = vsel %vm1104, %v13, 0.0
    %v1169 = vsel %vm1105, %v14, 0.0
    %v1170 = vsel %vm1106, %v15, 0.0
    %v1171 = vsel %vm1107, %v16, 0.0
    %v1172 = vsel %vm1108, %v17, 0.0
    %v1173 = vsel %vm1109, %v18, 0.0
    %v1174 = vsel %vm1110, %v19, 0.0
    %v1175 = vsel %vm1111, %v20, 0.0
    %v1176 = vsel %vm1112, %v21, 0.0
    %v1177 = vsel %vm1113, %v22, 0.0
    %v1178 = vsel %vm1114, %v23, 0.0
    %v1179 = vsel %vm1115, %v24, 0.0
    %v1180 = vsel %vm1116, %v25, 0.0
    %v1181 = vsel %vm1117, %v26, 0.0
    %v1182 = vsel %vm1118, %v27, 0.0
    %v1183 = vsel %vm1119, %v28, 0.0
    %v1184 = vsel %vm1120, %v29, 0.0
    %v1185 = vsel %vm1121, %v30, 0.0
    %v1186 = vsel %vm1122, %v31, 0.0
    %v1187 = vsel %vm1123, %v32, 0.0
    %v1188 = vsel %vm1124, %v33, 0.0
    %v1189 = vsel %vm1125, %v34, 0.0
    %v1190 = vsel %vm1126, %v35, 0.0
    %v1191 = vsel %vm1127, %v36, 0.0
    %v1192 = vsel %vm1128, %v37, 0.0
    %v1193 = vsel %vm1129, %v38, 0.0
    %v1194 = vsel %vm1130, %v39, 0.0
    %v1195 = vsel %vm1131, %v40, 0.0
    %v1196 = vsel %vm1132, %v41, 0.0
    %v1197 = vsel %vm1133, %v42, 0.0
    %v1198 = vsel %vm1134, %v43, 0.0
    %v1199 = vsel %vm1135, %v44, 0.0
    %v1200 = vsel %vm1136, %v45, 0.0
    %v1201 = vsel %vm1137, %v46, 0.0
    %v1202 = vsel %vm1138, %v47, 0.0
    %v1203 = vsel %vm1139, %v48, 0.0
    %v1204 = vsel %vm1140, %v49, 0.0
    %v1205 = vsel %vm1141, %v50, 0.0
    %v1206 = vsel %vm1142, %v51, 0.0
    %v1207 = vsel %vm1143, %v52, 0.0
    %v1208 = vsel %vm1144, %v53, 0.0
    %v1209 = vsel %vm1145, %v54, 0.0
    %v1210 = vsel %vm1146, %v55, 0.0
    %v1211 = vsel %vm1147, %v56, 0.0
    %v1212 = vsel %vm1148, %v57, 0.0
    %v1213 = vsel %vm1149, %v58, 0.0
    %v1214 = vsel %vm1150, %v59, 0.0
    %v1215 = vsel %vm1151, %v60, 0.0
    %v1216 = vsel %vm1152, %v61, 0.0
    %v1217 = vsel %vm1153, %v62, 0.0
    %v1218 = vsel %vm1154, %v63, 0.0
    %v1219 = vsel %vm1155, %v64, 0.0
    %v1220 = vsel %vm1156, %v65, 0.0
    %v1221 = vsel %vm1157, %v66, 0.0
    %v1222 = vsel %vm1158, %v67, 0.0
    %v1223 = vsel %vm1159, %v68, 0.0
    %v1224 = vsel %vm1160, %v69, 0.0
    %v1225 = vsel %vm1161, %v70, 0.0
    %v1226 = vsel %vm1162, %v71, 0.0
    %v1227 = vsel %vm1163, %v72, 0.0
    %v1228 = vsel %vm1164, %v73, 0.0
    %v1229 = vsel %vm1165, %v74, 0.0
    %v1230 = vsel %vm1166, %v75, 0.0
    %v1231 = vsel %vm140, %v1167, 0.0
    %1232 = vadd.xlane.f32.xlu0 %v1231
    %v1233 = vpop.xlane.xlu0 %1232
    %v1234 = vsel %vm140, %v1168, 0.0
    %1235 = vadd.xlane.f32.xlu0 %v1234
    %v1236 = vpop.xlane.xlu0 %1235
    %v1237 = vsel %vm140, %v1169, 0.0
    %1238 = vadd.xlane.f32.xlu0 %v1237
    %v1239 = vpop.xlane.xlu0 %1238
    %v1240 = vsel %vm140, %v1170, 0.0
    %1241 = vadd.xlane.f32.xlu0 %v1240
    %v1242 = vpop.xlane.xlu0 %1241
    %v1243 = vsel %vm140, %v1171, 0.0
    %1244 = vadd.xlane.f32.xlu0 %v1243
    %v1245 = vpop.xlane.xlu0 %1244
    %v1246 = vsel %vm140, %v1172, 0.0
    %1247 = vadd.xlane.f32.xlu0 %v1246
    %v1248 = vpop.xlane.xlu0 %1247
    %v1249 = vsel %vm140, %v1173, 0.0
    %1250 = vadd.xlane.f32.xlu0 %v1249
    %v1251 = vpop.xlane.xlu0 %1250
    %v1252 = vsel %vm140, %v1174, 0.0
    %1253 = vadd.xlane.f32.xlu0 %v1252
    %v1254 = vpop.xlane.xlu0 %1253
    %v1255 = vsel %vm140, %v1175, 0.0
    %1256 = vadd.xlane.f32.xlu0 %v1255
    %v1257 = vpop.xlane.xlu0 %1256
    %v1258 = vsel %vm140, %v1176, 0.0
    %1259 = vadd.xlane.f32.xlu0 %v1258
    %v1260 = vpop.xlane.xlu0 %1259
    %v1261 = vsel %vm140, %v1177, 0.0
    %1262 = vadd.xlane.f32.xlu0 %v1261
    %v1263 = vpop.xlane.xlu0 %1262
    %v1264 = vsel %vm140, %v1178, 0.0
    %1265 = vadd.xlane.f32.xlu0 %v1264
    %v1266 = vpop.xlane.xlu0 %1265
    %v1267 = vsel %vm140, %v1179, 0.0
    %1268 = vadd.xlane.f32.xlu0 %v1267
    %v1269 = vpop.xlane.xlu0 %1268
    %v1270 = vsel %vm140, %v1180, 0.0
    %1271 = vadd.xlane.f32.xlu0 %v1270
    %v1272 = vpop.xlane.xlu0 %1271
    %v1273 = vsel %vm140, %v1181, 0.0
    %1274 = vadd.xlane.f32.xlu0 %v1273
    %v1275 = vpop.xlane.xlu0 %1274
    %v1276 = vsel %vm140, %v1182, 0.0
    %1277 = vadd.xlane.f32.xlu0 %v1276
    %v1278 = vpop.xlane.xlu0 %1277
    %v1279 = vsel %vm140, %v1183, 0.0
    %1280 = vadd.xlane.f32.xlu0 %v1279
    %v1281 = vpop.xlane.xlu0 %1280
    %v1282 = vsel %vm140, %v1184, 0.0
    %1283 = vadd.xlane.f32.xlu0 %v1282
    %v1284 = vpop.xlane.xlu0 %1283
    %v1285 = vsel %vm140, %v1185, 0.0
    %1286 = vadd.xlane.f32.xlu0 %v1285
    %v1287 = vpop.xlane.xlu0 %1286
    %v1288 = vsel %vm140, %v1186, 0.0
    %1289 = vadd.xlane.f32.xlu0 %v1288
    %v1290 = vpop.xlane.xlu0 %1289
    %v1291 = vsel %vm140, %v1187, 0.0
    %1292 = vadd.xlane.f32.xlu0 %v1291
    %v1293 = vpop.xlane.xlu0 %1292
    %v1294 = vsel %vm140, %v1188, 0.0
    %1295 = vadd.xlane.f32.xlu0 %v1294
    %v1296 = vpop.xlane.xlu0 %1295
    %v1297 = vsel %vm140, %v1189, 0.0
    %1298 = vadd.xlane.f32.xlu0 %v1297
    %v1299 = vpop.xlane.xlu0 %1298
    %v1300 = vsel %vm140, %v1190, 0.0
    %1301 = vadd.xlane.f32.xlu0 %v1300
    %v1302 = vpop.xlane.xlu0 %1301
    %v1303 = vsel %vm140, %v1191, 0.0
    %1304 = vadd.xlane.f32.xlu0 %v1303
    %v1305 = vpop.xlane.xlu0 %1304
    %v1306 = vsel %vm140, %v1192, 0.0
    %1307 = vadd.xlane.f32.xlu0 %v1306
    %v1308 = vpop.xlane.xlu0 %1307
    %v1309 = vsel %vm140, %v1193, 0.0
    %1310 = vadd.xlane.f32.xlu0 %v1309
    %v1311 = vpop.xlane.xlu0 %1310
    %v1312 = vsel %vm140, %v1194, 0.0
    %1313 = vadd.xlane.f32.xlu0 %v1312
    %v1314 = vpop.xlane.xlu0 %1313
    %v1315 = vsel %vm140, %v1195, 0.0
    %1316 = vadd.xlane.f32.xlu0 %v1315
    %v1317 = vpop.xlane.xlu0 %1316
    %v1318 = vsel %vm140, %v1196, 0.0
    %1319 = vadd.xlane.f32.xlu0 %v1318
    %v1320 = vpop.xlane.xlu0 %1319
    %v1321 = vsel %vm140, %v1197, 0.0
    %1322 = vadd.xlane.f32.xlu0 %v1321
    %v1323 = vpop.xlane.xlu0 %1322
    %v1324 = vsel %vm140, %v1198, 0.0
    %1325 = vadd.xlane.f32.xlu0 %v1324
    %v1326 = vpop.xlane.xlu0 %1325
    %v1327 = vsel %vm140, %v1199, 0.0
    %1328 = vadd.xlane.f32.xlu0 %v1327
    %v1329 = vpop.xlane.xlu0 %1328
    %v1330 = vsel %vm140, %v1200, 0.0
    %1331 = vadd.xlane.f32.xlu0 %v1330
    %v1332 = vpop.xlane.xlu0 %1331
    %v1333 = vsel %vm140, %v1201, 0.0
    %1334 = vadd.xlane.f32.xlu0 %v1333
    %v1335 = vpop.xlane.xlu0 %1334
    %v1336 = vsel %vm140, %v1202, 0.0
    %1337 = vadd.xlane.f32.xlu0 %v1336
    %v1338 = vpop.xlane.xlu0 %1337
    %v1339 = vsel %vm140, %v1203, 0.0
    %1340 = vadd.xlane.f32.xlu0 %v1339
    %v1341 = vpop.xlane.xlu0 %1340
    %v1342 = vsel %vm140, %v1204, 0.0
    %1343 = vadd.xlane.f32.xlu0 %v1342
    %v1344 = vpop.xlane.xlu0 %1343
    %v1345 = vsel %vm140, %v1205, 0.0
    %1346 = vadd.xlane.f32.xlu0 %v1345
    %v1347 = vpop.xlane.xlu0 %1346
    %v1348 = vsel %vm140, %v1206, 0.0
    %1349 = vadd.xlane.f32.xlu0 %v1348
    %v1350 = vpop.xlane.xlu0 %1349
    %v1351 = vsel %vm140, %v1207, 0.0
    %1352 = vadd.xlane.f32.xlu0 %v1351
    %v1353 = vpop.xlane.xlu0 %1352
    %v1354 = vsel %vm140, %v1208, 0.0
    %1355 = vadd.xlane.f32.xlu0 %v1354
    %v1356 = vpop.xlane.xlu0 %1355
    %v1357 = vsel %vm140, %v1209, 0.0
    %1358 = vadd.xlane.f32.xlu0 %v1357
    %v1359 = vpop.xlane.xlu0 %1358
    %v1360 = vsel %vm140, %v1210, 0.0
    %1361 = vadd.xlane.f32.xlu0 %v1360
    %v1362 = vpop.xlane.xlu0 %1361
    %v1363 = vsel %vm140, %v1211, 0.0
    %1364 = vadd.xlane.f32.xlu0 %v1363
    %v1365 = vpop.xlane.xlu0 %1364
    %v1366 = vsel %vm140, %v1212, 0.0
    %1367 = vadd.xlane.f32.xlu0 %v1366
    %v1368 = vpop.xlane.xlu0 %1367
    %v1369 = vsel %vm140, %v1213, 0.0
    %1370 = vadd.xlane.f32.xlu0 %v1369
    %v1371 = vpop.xlane.xlu0 %1370
    %v1372 = vsel %vm140, %v1214, 0.0
    %1373 = vadd.xlane.f32.xlu0 %v1372
    %v1374 = vpop.xlane.xlu0 %1373
    %v1375 = vsel %vm140, %v1215, 0.0
    %1376 = vadd.xlane.f32.xlu0 %v1375
    %v1377 = vpop.xlane.xlu0 %1376
    %v1378 = vsel %vm140, %v1216, 0.0
    %1379 = vadd.xlane.f32.xlu0 %v1378
    %v1380 = vpop.xlane.xlu0 %1379
    %v1381 = vsel %vm140, %v1217, 0.0
    %1382 = vadd.xlane.f32.xlu0 %v1381
    %v1383 = vpop.xlane.xlu0 %1382
    %v1384 = vsel %vm140, %v1218, 0.0
    %1385 = vadd.xlane.f32.xlu0 %v1384
    %v1386 = vpop.xlane.xlu0 %1385
    %v1387 = vsel %vm140, %v1219, 0.0
    %1388 = vadd.xlane.f32.xlu0 %v1387
    %v1389 = vpop.xlane.xlu0 %1388
    %v1390 = vsel %vm140, %v1220, 0.0
    %1391 = vadd.xlane.f32.xlu0 %v1390
    %v1392 = vpop.xlane.xlu0 %1391
    %v1393 = vsel %vm140, %v1221, 0.0
    %1394 = vadd.xlane.f32.xlu0 %v1393
    %v1395 = vpop.xlane.xlu0 %1394
    %v1396 = vsel %vm140, %v1222, 0.0
    %1397 = vadd.xlane.f32.xlu0 %v1396
    %v1398 = vpop.xlane.xlu0 %1397
    %v1399 = vsel %vm140, %v1223, 0.0
    %1400 = vadd.xlane.f32.xlu0 %v1399
    %v1401 = vpop.xlane.xlu0 %1400
    %v1402 = vsel %vm140, %v1224, 0.0
    %1403 = vadd.xlane.f32.xlu0 %v1402
    %v1404 = vpop.xlane.xlu0 %1403
    %v1405 = vsel %vm140, %v1225, 0.0
    %1406 = vadd.xlane.f32.xlu0 %v1405
    %v1407 = vpop.xlane.xlu0 %1406
    %v1408 = vsel %vm140, %v1226, 0.0
    %1409 = vadd.xlane.f32.xlu0 %v1408
    %v1410 = vpop.xlane.xlu0 %1409
    %v1411 = vsel %vm140, %v1227, 0.0
    %1412 = vadd.xlane.f32.xlu0 %v1411
    %v1413 = vpop.xlane.xlu0 %1412
    %v1414 = vsel %vm140, %v1228, 0.0
    %1415 = vadd.xlane.f32.xlu0 %v1414
    %v1416 = vpop.xlane.xlu0 %1415
    %v1417 = vsel %vm140, %v1229, 0.0
    %1418 = vadd.xlane.f32.xlu0 %v1417
    %v1419 = vpop.xlane.xlu0 %1418
    %v1420 = vsel %vm140, %v1230, 0.0
    %1421 = vadd.xlane.f32.xlu0 %v1420
    %v1422 = vpop.xlane.xlu0 %1421
    %s1423 = smul.u32 0, 512
    %v1424 = vlaneseq
    %v1425 = vshrl.u32 %v1424, 7
    %v1426 = vadd.s32 %v1425, 8
    %v1427 = vadd.s32 %v1425, 16
    %v1428 = vadd.s32 %v1425, 24
    %v1429 = vadd.s32 %v1425, 32
    %v1430 = vadd.s32 %v1425, 40
    %v1431 = vadd.s32 %v1425, 48
    %v1432 = vadd.s32 %v1425, 56
    %v1433 = vadd.s32 %v1425, 64
    %v1434 = vadd.s32 %v1425, 72
    %v1435 = vadd.s32 %v1425, 80
    %v1436 = vadd.s32 %v1425, 88
    %v1437 = vadd.s32 %v1425, 96
    %v1438 = vadd.s32 %v1425, 104
    %v1439 = vadd.s32 %v1425, 112
    %v1440 = vadd.s32 %v1425, 120
    %v1441 = vadd.s32 %v1425, 128
    %v1442 = vadd.s32 %v1425, 136
    %v1443 = vadd.s32 %v1425, 144
    %v1444 = vadd.s32 %v1425, 152
    %v1445 = vadd.s32 %v1425, 160
    %v1446 = vadd.s32 %v1425, 168
    %v1447 = vadd.s32 %v1425, 176
    %v1448 = vadd.s32 %v1425, 184
    %v1449 = vadd.s32 %v1425, 192
    %v1450 = vadd.s32 %v1425, 200
    %v1451 = vadd.s32 %v1425, 208
    %v1452 = vadd.s32 %v1425, 216
    %v1453 = vadd.s32 %v1425, 224
    %v1454 = vadd.s32 %v1425, 232
    %v1455 = vadd.s32 %v1425, 240
    %v1456 = vadd.s32 %v1425, 248
    %v1457 = vadd.s32 %v1425, 256
    %v1458 = vadd.s32 %v1425, 264
    %v1459 = vadd.s32 %v1425, 272
    %v1460 = vadd.s32 %v1425, 280
    %v1461 = vadd.s32 %v1425, 288
    %v1462 = vadd.s32 %v1425, 296
    %v1463 = vadd.s32 %v1425, 304
    %v1464 = vadd.s32 %v1425, 312
    %v1465 = vadd.s32 %v1425, 320
    %v1466 = vadd.s32 %v1425, 328
    %v1467 = vadd.s32 %v1425, 336
    %v1468 = vadd.s32 %v1425, 344
    %v1469 = vadd.s32 %v1425, 352
    %v1470 = vadd.s32 %v1425, 360
    %v1471 = vadd.s32 %v1425, 368
    %v1472 = vadd.s32 %v1425, 376
    %v1473 = vadd.s32 %v1425, 384
    %v1474 = vadd.s32 %v1425, 392
    %v1475 = vadd.s32 %v1425, 400
    %v1476 = vadd.s32 %v1425, 408
    %v1477 = vadd.s32 %v1425, 416
    %v1478 = vadd.s32 %v1425, 424
    %v1479 = vadd.s32 %v1425, 432
    %v1480 = vadd.s32 %v1425, 440
    %v1481 = vadd.s32 %v1425, 448
    %v1482 = vadd.s32 %v1425, 456
    %v1483 = vadd.s32 %v1425, 464
    %v1484 = vadd.s32 %v1425, 472
    %v1485 = vadd.s32 %v1425, 480
    %v1486 = vadd.s32 %v1425, 488
    %v1487 = vadd.s32 %v1425, 496
    %v1488 = vadd.s32 %v1425, 504
    %v1489 = vstv %s1423
    %v1490 = vadd.s32 %v1489, %v1425
    %v1491 = vadd.s32 %v1489, %v1426
    %v1492 = vadd.s32 %v1489, %v1427
    %v1493 = vadd.s32 %v1489, %v1428
    %v1494 = vadd.s32 %v1489, %v1429
    %v1495 = vadd.s32 %v1489, %v1430
    %v1496 = vadd.s32 %v1489, %v1431
    %v1497 = vadd.s32 %v1489, %v1432
    %v1498 = vadd.s32 %v1489, %v1433
    %v1499 = vadd.s32 %v1489, %v1434
    %v1500 = vadd.s32 %v1489, %v1435
    %v1501 = vadd.s32 %v1489, %v1436
    %v1502 = vadd.s32 %v1489, %v1437
    %v1503 = vadd.s32 %v1489, %v1438
    %v1504 = vadd.s32 %v1489, %v1439
    %v1505 = vadd.s32 %v1489, %v1440
    %v1506 = vadd.s32 %v1489, %v1441
    %v1507 = vadd.s32 %v1489, %v1442
    %v1508 = vadd.s32 %v1489, %v1443
    %v1509 = vadd.s32 %v1489, %v1444
    %v1510 = vadd.s32 %v1489, %v1445
    %v1511 = vadd.s32 %v1489, %v1446
    %v1512 = vadd.s32 %v1489, %v1447
    %v1513 = vadd.s32 %v1489, %v1448
    %v1514 = vadd.s32 %v1489, %v1449
    %v1515 = vadd.s32 %v1489, %v1450
    %v1516 = vadd.s32 %v1489, %v1451
    %v1517 = vadd.s32 %v1489, %v1452
    %v1518 = vadd.s32 %v1489, %v1453
    %v1519 = vadd.s32 %v1489, %v1454
    %v1520 = vadd.s32 %v1489, %v1455
    %v1521 = vadd.s32 %v1489, %v1456
    %v1522 = vadd.s32 %v1489, %v1457
    %v1523 = vadd.s32 %v1489, %v1458
    %v1524 = vadd.s32 %v1489, %v1459
    %v1525 = vadd.s32 %v1489, %v1460
    %v1526 = vadd.s32 %v1489, %v1461
    %v1527 = vadd.s32 %v1489, %v1462
    %v1528 = vadd.s32 %v1489, %v1463
    %v1529 = vadd.s32 %v1489, %v1464
    %v1530 = vadd.s32 %v1489, %v1465
    %v1531 = vadd.s32 %v1489, %v1466
    %v1532 = vadd.s32 %v1489, %v1467
    %v1533 = vadd.s32 %v1489, %v1468
    %v1534 = vadd.s32 %v1489, %v1469
    %v1535 = vadd.s32 %v1489, %v1470
    %v1536 = vadd.s32 %v1489, %v1471
    %v1537 = vadd.s32 %v1489, %v1472
    %v1538 = vadd.s32 %v1489, %v1473
    %v1539 = vadd.s32 %v1489, %v1474
    %v1540 = vadd.s32 %v1489, %v1475
    %v1541 = vadd.s32 %v1489, %v1476
    %v1542 = vadd.s32 %v1489, %v1477
    %v1543 = vadd.s32 %v1489, %v1478
    %v1544 = vadd.s32 %v1489, %v1479
    %v1545 = vadd.s32 %v1489, %v1480
    %v1546 = vadd.s32 %v1489, %v1481
    %v1547 = vadd.s32 %v1489, %v1482
    %v1548 = vadd.s32 %v1489, %v1483
    %v1549 = vadd.s32 %v1489, %v1484
    %v1550 = vadd.s32 %v1489, %v1485
    %v1551 = vadd.s32 %v1489, %v1486
    %v1552 = vadd.s32 %v1489, %v1487
    %v1553 = vadd.s32 %v1489, %v1488
    %vm1554 = vcmp.ne.s32.totalorder %v76, 255
    %vm1555 = vcmp.ne.s32.totalorder %v77, 255
    %vm1556 = vcmp.ne.s32.totalorder %v78, 255
    %vm1557 = vcmp.ne.s32.totalorder %v79, 255
    %vm1558 = vcmp.ne.s32.totalorder %v80, 255
    %vm1559 = vcmp.ne.s32.totalorder %v81, 255
    %vm1560 = vcmp.ne.s32.totalorder %v82, 255
    %vm1561 = vcmp.ne.s32.totalorder %v83, 255
    %vm1562 = vcmp.ne.s32.totalorder %v84, 255
    %vm1563 = vcmp.ne.s32.totalorder %v85, 255
    %vm1564 = vcmp.ne.s32.totalorder %v86, 255
    %vm1565 = vcmp.ne.s32.totalorder %v87, 255
    %vm1566 = vcmp.ne.s32.totalorder %v88, 255
    %vm1567 = vcmp.ne.s32.totalorder %v89, 255
    %vm1568 = vcmp.ne.s32.totalorder %v90, 255
    %vm1569 = vcmp.ne.s32.totalorder %v91, 255
    %vm1570 = vcmp.ne.s32.totalorder %v92, 255
    %vm1571 = vcmp.ne.s32.totalorder %v93, 255
    %vm1572 = vcmp.ne.s32.totalorder %v94, 255
    %vm1573 = vcmp.ne.s32.totalorder %v95, 255
    %vm1574 = vcmp.ne.s32.totalorder %v96, 255
    %vm1575 = vcmp.ne.s32.totalorder %v97, 255
    %vm1576 = vcmp.ne.s32.totalorder %v98, 255
    %vm1577 = vcmp.ne.s32.totalorder %v99, 255
    %vm1578 = vcmp.ne.s32.totalorder %v100, 255
    %vm1579 = vcmp.ne.s32.totalorder %v101, 255
    %vm1580 = vcmp.ne.s32.totalorder %v102, 255
    %vm1581 = vcmp.ne.s32.totalorder %v103, 255
    %vm1582 = vcmp.ne.s32.totalorder %v104, 255
    %vm1583 = vcmp.ne.s32.totalorder %v105, 255
    %vm1584 = vcmp.ne.s32.totalorder %v106, 255
    %vm1585 = vcmp.ne.s32.totalorder %v107, 255
    %vm1586 = vcmp.ne.s32.totalorder %v108, 255
    %vm1587 = vcmp.ne.s32.totalorder %v109, 255
    %vm1588 = vcmp.ne.s32.totalorder %v110, 255
    %vm1589 = vcmp.ne.s32.totalorder %v111, 255
    %vm1590 = vcmp.ne.s32.totalorder %v112, 255
    %vm1591 = vcmp.ne.s32.totalorder %v113, 255
    %vm1592 = vcmp.ne.s32.totalorder %v114, 255
    %vm1593 = vcmp.ne.s32.totalorder %v115, 255
    %vm1594 = vcmp.ne.s32.totalorder %v116, 255
    %vm1595 = vcmp.ne.s32.totalorder %v117, 255
    %vm1596 = vcmp.ne.s32.totalorder %v118, 255
    %vm1597 = vcmp.ne.s32.totalorder %v119, 255
    %vm1598 = vcmp.ne.s32.totalorder %v120, 255
    %vm1599 = vcmp.ne.s32.totalorder %v121, 255
    %vm1600 = vcmp.ne.s32.totalorder %v122, 255
    %vm1601 = vcmp.ne.s32.totalorder %v123, 255
    %vm1602 = vcmp.ne.s32.totalorder %v124, 255
    %vm1603 = vcmp.ne.s32.totalorder %v125, 255
    %vm1604 = vcmp.ne.s32.totalorder %v126, 255
    %vm1605 = vcmp.ne.s32.totalorder %v127, 255
    %vm1606 = vcmp.ne.s32.totalorder %v128, 255
    %vm1607 = vcmp.ne.s32.totalorder %v129, 255
    %vm1608 = vcmp.ne.s32.totalorder %v130, 255
    %vm1609 = vcmp.ne.s32.totalorder %v131, 255
    %vm1610 = vcmp.ne.s32.totalorder %v132, 255
    %vm1611 = vcmp.ne.s32.totalorder %v133, 255
    %vm1612 = vcmp.ne.s32.totalorder %v134, 255
    %vm1613 = vcmp.ne.s32.totalorder %v135, 255
    %vm1614 = vcmp.ne.s32.totalorder %v136, 255
    %vm1615 = vcmp.ne.s32.totalorder %v137, 255
    %vm1616 = vcmp.ne.s32.totalorder %v138, 255
    %vm1617 = vcmp.ne.s32.totalorder %v139, 255
    %vm1618 = vcmp.lt.s32.totalorder %v1490, 512
    %vm1619 = vcmp.lt.s32.totalorder %v1491, 512
    %vm1620 = vcmp.lt.s32.totalorder %v1492, 512
    %vm1621 = vcmp.lt.s32.totalorder %v1493, 512
    %vm1622 = vcmp.lt.s32.totalorder %v1494, 512
    %vm1623 = vcmp.lt.s32.totalorder %v1495, 512
    %vm1624 = vcmp.lt.s32.totalorder %v1496, 512
    %vm1625 = vcmp.lt.s32.totalorder %v1497, 512
    %vm1626 = vcmp.lt.s32.totalorder %v1498, 512
    %vm1627 = vcmp.lt.s32.totalorder %v1499, 512
    %vm1628 = vcmp.lt.s32.totalorder %v1500, 512
    %vm1629 = vcmp.lt.s32.totalorder %v1501, 512
    %vm1630 = vcmp.lt.s32.totalorder %v1502, 512
    %vm1631 = vcmp.lt.s32.totalorder %v1503, 512
    %vm1632 = vcmp.lt.s32.totalorder %v1504, 512
    %vm1633 = vcmp.lt.s32.totalorder %v1505, 512
    %vm1634 = vcmp.lt.s32.totalorder %v1506, 512
    %vm1635 = vcmp.lt.s32.totalorder %v1507, 512
    %vm1636 = vcmp.lt.s32.totalorder %v1508, 512
    %vm1637 = vcmp.lt.s32.totalorder %v1509, 512
    %vm1638 = vcmp.lt.s32.totalorder %v1510, 512
    %vm1639 = vcmp.lt.s32.totalorder %v1511, 512
    %vm1640 = vcmp.lt.s32.totalorder %v1512, 512
    %vm1641 = vcmp.lt.s32.totalorder %v1513, 512
    %vm1642 = vcmp.lt.s32.totalorder %v1514, 512
    %vm1643 = vcmp.lt.s32.totalorder %v1515, 512
    %vm1644 = vcmp.lt.s32.totalorder %v1516, 512
    %vm1645 = vcmp.lt.s32.totalorder %v1517, 512
    %vm1646 = vcmp.lt.s32.totalorder %v1518, 512
    %vm1647 = vcmp.lt.s32.totalorder %v1519, 512
    %vm1648 = vcmp.lt.s32.totalorder %v1520, 512
    %vm1649 = vcmp.lt.s32.totalorder %v1521, 512
    %vm1650 = vcmp.lt.s32.totalorder %v1522, 512
    %vm1651 = vcmp.lt.s32.totalorder %v1523, 512
    %vm1652 = vcmp.lt.s32.totalorder %v1524, 512
    %vm1653 = vcmp.lt.s32.totalorder %v1525, 512
    %vm1654 = vcmp.lt.s32.totalorder %v1526, 512
    %vm1655 = vcmp.lt.s32.totalorder %v1527, 512
    %vm1656 = vcmp.lt.s32.totalorder %v1528, 512
    %vm1657 = vcmp.lt.s32.totalorder %v1529, 512
    %vm1658 = vcmp.lt.s32.totalorder %v1530, 512
    %vm1659 = vcmp.lt.s32.totalorder %v1531, 512
    %vm1660 = vcmp.lt.s32.totalorder %v1532, 512
    %vm1661 = vcmp.lt.s32.totalorder %v1533, 512
    %vm1662 = vcmp.lt.s32.totalorder %v1534, 512
    %vm1663 = vcmp.lt.s32.totalorder %v1535, 512
    %vm1664 = vcmp.lt.s32.totalorder %v1536, 512
    %vm1665 = vcmp.lt.s32.totalorder %v1537, 512
    %vm1666 = vcmp.lt.s32.totalorder %v1538, 512
    %vm1667 = vcmp.lt.s32.totalorder %v1539, 512
    %vm1668 = vcmp.lt.s32.totalorder %v1540, 512
    %vm1669 = vcmp.lt.s32.totalorder %v1541, 512
    %vm1670 = vcmp.lt.s32.totalorder %v1542, 512
    %vm1671 = vcmp.lt.s32.totalorder %v1543, 512
    %vm1672 = vcmp.lt.s32.totalorder %v1544, 512
    %vm1673 = vcmp.lt.s32.totalorder %v1545, 512
    %vm1674 = vcmp.lt.s32.totalorder %v1546, 512
    %vm1675 = vcmp.lt.s32.totalorder %v1547, 512
    %vm1676 = vcmp.lt.s32.totalorder %v1548, 512
    %vm1677 = vcmp.lt.s32.totalorder %v1549, 512
    %vm1678 = vcmp.lt.s32.totalorder %v1550, 512
    %vm1679 = vcmp.lt.s32.totalorder %v1551, 512
    %vm1680 = vcmp.lt.s32.totalorder %v1552, 512
    %vm1681 = vcmp.lt.s32.totalorder %v1553, 512
    %vm1682 = vmand %vm1554, %vm1618
    %vm1683 = vmand %vm1555, %vm1619
    %vm1684 = vmand %vm1556, %vm1620
    %vm1685 = vmand %vm1557, %vm1621
    %vm1686 = vmand %vm1558, %vm1622
    %vm1687 = vmand %vm1559, %vm1623
    %vm1688 = vmand %vm1560, %vm1624
    %vm1689 = vmand %vm1561, %vm1625
    %vm1690 = vmand %vm1562, %vm1626
    %vm1691 = vmand %vm1563, %vm1627
    %vm1692 = vmand %vm1564, %vm1628
    %vm1693 = vmand %vm1565, %vm1629
    %vm1694 = vmand %vm1566, %vm1630
    %vm1695 = vmand %vm1567, %vm1631
    %vm1696 = vmand %vm1568, %vm1632
    %vm1697 = vmand %vm1569, %vm1633
    %vm1698 = vmand %vm1570, %vm1634
    %vm1699 = vmand %vm1571, %vm1635
    %vm1700 = vmand %vm1572, %vm1636
    %vm1701 = vmand %vm1573, %vm1637
    %vm1702 = vmand %vm1574, %vm1638
    %vm1703 = vmand %vm1575, %vm1639
    %vm1704 = vmand %vm1576, %vm1640
    %vm1705 = vmand %vm1577, %vm1641
    %vm1706 = vmand %vm1578, %vm1642
    %vm1707 = vmand %vm1579, %vm1643
    %vm1708 = vmand %vm1580, %vm1644
    %vm1709 = vmand %vm1581, %vm1645
    %vm1710 = vmand %vm1582, %vm1646
    %vm1711 = vmand %vm1583, %vm1647
    %vm1712 = vmand %vm1584, %vm1648
    %vm1713 = vmand %vm1585, %vm1649
    %vm1714 = vmand %vm1586, %vm1650
    %vm1715 = vmand %vm1587, %vm1651
    %vm1716 = vmand %vm1588, %vm1652
    %vm1717 = vmand %vm1589, %vm1653
    %vm1718 = vmand %vm1590, %vm1654
    %vm1719 = vmand %vm1591, %vm1655
    %vm1720 = vmand %vm1592, %vm1656
    %vm1721 = vmand %vm1593, %vm1657
    %vm1722 = vmand %vm1594, %vm1658
    %vm1723 = vmand %vm1595, %vm1659
    %vm1724 = vmand %vm1596, %vm1660
    %vm1725 = vmand %vm1597, %vm1661
    %vm1726 = vmand %vm1598, %vm1662
    %vm1727 = vmand %vm1599, %vm1663
    %vm1728 = vmand %vm1600, %vm1664
    %vm1729 = vmand %vm1601, %vm1665
    %vm1730 = vmand %vm1602, %vm1666
    %vm1731 = vmand %vm1603, %vm1667
    %vm1732 = vmand %vm1604, %vm1668
    %vm1733 = vmand %vm1605, %vm1669
    %vm1734 = vmand %vm1606, %vm1670
    %vm1735 = vmand %vm1607, %vm1671
    %vm1736 = vmand %vm1608, %vm1672
    %vm1737 = vmand %vm1609, %vm1673
    %vm1738 = vmand %vm1610, %vm1674
    %vm1739 = vmand %vm1611, %vm1675
    %vm1740 = vmand %vm1612, %vm1676
    %vm1741 = vmand %vm1613, %vm1677
    %vm1742 = vmand %vm1614, %vm1678
    %vm1743 = vmand %vm1615, %vm1679
    %vm1744 = vmand %vm1616, %vm1680
    %vm1745 = vmand %vm1617, %vm1681
    %v1746 = vsub.f32 %v845, %v1233
    %v1747 = vsub.f32 %v846, %v1236
    %v1748 = vsub.f32 %v847, %v1239
    %v1749 = vsub.f32 %v848, %v1242
    %v1750 = vsub.f32 %v849, %v1245
    %v1751 = vsub.f32 %v850, %v1248
    %v1752 = vsub.f32 %v851, %v1251
    %v1753 = vsub.f32 %v852, %v1254
    %v1754 = vsub.f32 %v853, %v1257
    %v1755 = vsub.f32 %v854, %v1260
    %v1756 = vsub.f32 %v855, %v1263
    %v1757 = vsub.f32 %v856, %v1266
    %v1758 = vsub.f32 %v857, %v1269
    %v1759 = vsub.f32 %v858, %v1272
    %v1760 = vsub.f32 %v859, %v1275
    %v1761 = vsub.f32 %v860, %v1278
    %v1762 = vsub.f32 %v861, %v1281
    %v1763 = vsub.f32 %v862, %v1284
    %v1764 = vsub.f32 %v863, %v1287
    %v1765 = vsub.f32 %v864, %v1290
    %v1766 = vsub.f32 %v865, %v1293
    %v1767 = vsub.f32 %v866, %v1296
    %v1768 = vsub.f32 %v867, %v1299
    %v1769 = vsub.f32 %v868, %v1302
    %v1770 = vsub.f32 %v869, %v1305
    %v1771 = vsub.f32 %v870, %v1308
    %v1772 = vsub.f32 %v871, %v1311
    %v1773 = vsub.f32 %v872, %v1314
    %v1774 = vsub.f32 %v873, %v1317
    %v1775 = vsub.f32 %v874, %v1320
    %v1776 = vsub.f32 %v875, %v1323
    %v1777 = vsub.f32 %v876, %v1326
    %v1778 = vsub.f32 %v877, %v1329
    %v1779 = vsub.f32 %v878, %v1332
    %v1780 = vsub.f32 %v879, %v1335
    %v1781 = vsub.f32 %v880, %v1338
    %v1782 = vsub.f32 %v881, %v1341
    %v1783 = vsub.f32 %v882, %v1344
    %v1784 = vsub.f32 %v883, %v1347
    %v1785 = vsub.f32 %v884, %v1350
    %v1786 = vsub.f32 %v885, %v1353
    %v1787 = vsub.f32 %v886, %v1356
    %v1788 = vsub.f32 %v887, %v1359
    %v1789 = vsub.f32 %v888, %v1362
    %v1790 = vsub.f32 %v889, %v1365
    %v1791 = vsub.f32 %v890, %v1368
    %v1792 = vsub.f32 %v891, %v1371
    %v1793 = vsub.f32 %v892, %v1374
    %v1794 = vsub.f32 %v893, %v1377
    %v1795 = vsub.f32 %v894, %v1380
    %v1796 = vsub.f32 %v895, %v1383
    %v1797 = vsub.f32 %v896, %v1386
    %v1798 = vsub.f32 %v897, %v1389
    %v1799 = vsub.f32 %v898, %v1392
    %v1800 = vsub.f32 %v899, %v1395
    %v1801 = vsub.f32 %v900, %v1398
    %v1802 = vsub.f32 %v901, %v1401
    %v1803 = vsub.f32 %v902, %v1404
    %v1804 = vsub.f32 %v903, %v1407
    %v1805 = vsub.f32 %v904, %v1410
    %v1806 = vsub.f32 %v905, %v1413
    %v1807 = vsub.f32 %v906, %v1416
    %v1808 = vsub.f32 %v907, %v1419
    %v1809 = vsub.f32 %v908, %v1422
    %v1810 = vsel %vm1682, %v1746, 0.0
    %v1811 = vsel %vm1683, %v1747, 0.0
    %v1812 = vsel %vm1684, %v1748, 0.0
    %v1813 = vsel %vm1685, %v1749, 0.0
    %v1814 = vsel %vm1686, %v1750, 0.0
    %v1815 = vsel %vm1687, %v1751, 0.0
    %v1816 = vsel %vm1688, %v1752, 0.0
    %v1817 = vsel %vm1689, %v1753, 0.0
    %v1818 = vsel %vm1690, %v1754, 0.0
    %v1819 = vsel %vm1691, %v1755, 0.0
    %v1820 = vsel %vm1692, %v1756, 0.0
    %v1821 = vsel %vm1693, %v1757, 0.0
    %v1822 = vsel %vm1694, %v1758, 0.0
    %v1823 = vsel %vm1695, %v1759, 0.0
    %v1824 = vsel %vm1696, %v1760, 0.0
    %v1825 = vsel %vm1697, %v1761, 0.0
    %v1826 = vsel %vm1698, %v1762, 0.0
    %v1827 = vsel %vm1699, %v1763, 0.0
    %v1828 = vsel %vm1700, %v1764, 0.0
    %v1829 = vsel %vm1701, %v1765, 0.0
    %v1830 = vsel %vm1702, %v1766, 0.0
    %v1831 = vsel %vm1703, %v1767, 0.0
    %v1832 = vsel %vm1704, %v1768, 0.0
    %v1833 = vsel %vm1705, %v1769, 0.0
    %v1834 = vsel %vm1706, %v1770, 0.0
    %v1835 = vsel %vm1707, %v1771, 0.0
    %v1836 = vsel %vm1708, %v1772, 0.0
    %v1837 = vsel %vm1709, %v1773, 0.0
    %v1838 = vsel %vm1710, %v1774, 0.0
    %v1839 = vsel %vm1711, %v1775, 0.0
    %v1840 = vsel %vm1712, %v1776, 0.0
    %v1841 = vsel %vm1713, %v1777, 0.0
    %v1842 = vsel %vm1714, %v1778, 0.0
    %v1843 = vsel %vm1715, %v1779, 0.0
    %v1844 = vsel %vm1716, %v1780, 0.0
    %v1845 = vsel %vm1717, %v1781, 0.0
    %v1846 = vsel %vm1718, %v1782, 0.0
    %v1847 = vsel %vm1719, %v1783, 0.0
    %v1848 = vsel %vm1720, %v1784, 0.0
    %v1849 = vsel %vm1721, %v1785, 0.0
    %v1850 = vsel %vm1722, %v1786, 0.0
    %v1851 = vsel %vm1723, %v1787, 0.0
    %v1852 = vsel %vm1724, %v1788, 0.0
    %v1853 = vsel %vm1725, %v1789, 0.0
    %v1854 = vsel %vm1726, %v1790, 0.0
    %v1855 = vsel %vm1727, %v1791, 0.0
    %v1856 = vsel %vm1728, %v1792, 0.0
    %v1857 = vsel %vm1729, %v1793, 0.0
    %v1858 = vsel %vm1730, %v1794, 0.0
    %v1859 = vsel %vm1731, %v1795, 0.0
    %v1860 = vsel %vm1732, %v1796, 0.0
    %v1861 = vsel %vm1733, %v1797, 0.0
    %v1862 = vsel %vm1734, %v1798, 0.0
    %v1863 = vsel %vm1735, %v1799, 0.0
    %v1864 = vsel %vm1736, %v1800, 0.0
    %v1865 = vsel %vm1737, %v1801, 0.0
    %v1866 = vsel %vm1738, %v1802, 0.0
    %v1867 = vsel %vm1739, %v1803, 0.0
    %v1868 = vsel %vm1740, %v1804, 0.0
    %v1869 = vsel %vm1741, %v1805, 0.0
    %v1870 = vsel %vm1742, %v1806, 0.0
    %v1871 = vsel %vm1743, %v1807, 0.0
    %v1872 = vsel %vm1744, %v1808, 0.0
    %v1873 = vsel %vm1745, %v1809, 0.0
    %vm1874 = vcmask 7168
    %v1875 = vsel %vm1874, %v1810, 0.0
    %v1876 = vsel %vm1874, %v1811, 0.0
    %v1877 = vadd.f32 %v1875, %v1876
    %v1878 = vsel %vm1874, %v1812, 0.0
    %v1879 = vadd.f32 %v1877, %v1878
    %v1880 = vsel %vm1874, %v1813, 0.0
    %v1881 = vadd.f32 %v1879, %v1880
    %v1882 = vsel %vm1874, %v1814, 0.0
    %v1883 = vadd.f32 %v1881, %v1882
    %v1884 = vsel %vm1874, %v1815, 0.0
    %v1885 = vadd.f32 %v1883, %v1884
    %v1886 = vsel %vm1874, %v1816, 0.0
    %v1887 = vadd.f32 %v1885, %v1886
    %v1888 = vsel %vm1874, %v1817, 0.0
    %v1889 = vadd.f32 %v1887, %v1888
    %v1890 = vsel %vm1874, %v1818, 0.0
    %v1891 = vadd.f32 %v1889, %v1890
    %v1892 = vsel %vm1874, %v1819, 0.0
    %v1893 = vadd.f32 %v1891, %v1892
    %v1894 = vsel %vm1874, %v1820, 0.0
    %v1895 = vadd.f32 %v1893, %v1894
    %v1896 = vsel %vm1874, %v1821, 0.0
    %v1897 = vadd.f32 %v1895, %v1896
    %v1898 = vsel %vm1874, %v1822, 0.0
    %v1899 = vadd.f32 %v1897, %v1898
    %v1900 = vsel %vm1874, %v1823, 0.0
    %v1901 = vadd.f32 %v1899, %v1900
    %v1902 = vsel %vm1874, %v1824, 0.0
    %v1903 = vadd.f32 %v1901, %v1902
    %v1904 = vsel %vm1874, %v1825, 0.0
    %v1905 = vadd.f32 %v1903, %v1904
    %v1906 = vsel %vm1874, %v1826, 0.0
    %v1907 = vadd.f32 %v1905, %v1906
    %v1908 = vsel %vm1874, %v1827, 0.0
    %v1909 = vadd.f32 %v1907, %v1908
    %v1910 = vsel %vm1874, %v1828, 0.0
    %v1911 = vadd.f32 %v1909, %v1910
    %v1912 = vsel %vm1874, %v1829, 0.0
    %v1913 = vadd.f32 %v1911, %v1912
    %v1914 = vsel %vm1874, %v1830, 0.0
    %v1915 = vadd.f32 %v1913, %v1914
    %v1916 = vsel %vm1874, %v1831, 0.0
    %v1917 = vadd.f32 %v1915, %v1916
    %v1918 = vsel %vm1874, %v1832, 0.0
    %v1919 = vadd.f32 %v1917, %v1918
    %v1920 = vsel %vm1874, %v1833, 0.0
    %v1921 = vadd.f32 %v1919, %v1920
    %v1922 = vsel %vm1874, %v1834, 0.0
    %v1923 = vadd.f32 %v1921, %v1922
    %v1924 = vsel %vm1874, %v1835, 0.0
    %v1925 = vadd.f32 %v1923, %v1924
    %v1926 = vsel %vm1874, %v1836, 0.0
    %v1927 = vadd.f32 %v1925, %v1926
    %v1928 = vsel %vm1874, %v1837, 0.0
    %v1929 = vadd.f32 %v1927, %v1928
    %v1930 = vsel %vm1874, %v1838, 0.0
    %v1931 = vadd.f32 %v1929, %v1930
    %v1932 = vsel %vm1874, %v1839, 0.0
    %v1933 = vadd.f32 %v1931, %v1932
    %v1934 = vsel %vm1874, %v1840, 0.0
    %v1935 = vadd.f32 %v1933, %v1934
    %v1936 = vsel %vm1874, %v1841, 0.0
    %v1937 = vadd.f32 %v1935, %v1936
    %v1938 = vsel %vm1874, %v1842, 0.0
    %v1939 = vadd.f32 %v1937, %v1938
    %v1940 = vsel %vm1874, %v1843, 0.0
    %v1941 = vadd.f32 %v1939, %v1940
    %v1942 = vsel %vm1874, %v1844, 0.0
    %v1943 = vadd.f32 %v1941, %v1942
    %v1944 = vsel %vm1874, %v1845, 0.0
    %v1945 = vadd.f32 %v1943, %v1944
    %v1946 = vsel %vm1874, %v1846, 0.0
    %v1947 = vadd.f32 %v1945, %v1946
    %v1948 = vsel %vm1874, %v1847, 0.0
    %v1949 = vadd.f32 %v1947, %v1948
    %v1950 = vsel %vm1874, %v1848, 0.0
    %v1951 = vadd.f32 %v1949, %v1950
    %v1952 = vsel %vm1874, %v1849, 0.0
    %v1953 = vadd.f32 %v1951, %v1952
    %v1954 = vsel %vm1874, %v1850, 0.0
    %v1955 = vadd.f32 %v1953, %v1954
    %v1956 = vsel %vm1874, %v1851, 0.0
    %v1957 = vadd.f32 %v1955, %v1956
    %v1958 = vsel %vm1874, %v1852, 0.0
    %v1959 = vadd.f32 %v1957, %v1958
    %v1960 = vsel %vm1874, %v1853, 0.0
    %v1961 = vadd.f32 %v1959, %v1960
    %v1962 = vsel %vm1874, %v1854, 0.0
    %v1963 = vadd.f32 %v1961, %v1962
    %v1964 = vsel %vm1874, %v1855, 0.0
    %v1965 = vadd.f32 %v1963, %v1964
    %v1966 = vsel %vm1874, %v1856, 0.0
    %v1967 = vadd.f32 %v1965, %v1966
    %v1968 = vsel %vm1874, %v1857, 0.0
    %v1969 = vadd.f32 %v1967, %v1968
    %v1970 = vsel %vm1874, %v1858, 0.0
    %v1971 = vadd.f32 %v1969, %v1970
    %v1972 = vsel %vm1874, %v1859, 0.0
    %v1973 = vadd.f32 %v1971, %v1972
    %v1974 = vsel %vm1874, %v1860, 0.0
    %v1975 = vadd.f32 %v1973, %v1974
    %v1976 = vsel %vm1874, %v1861, 0.0
    %v1977 = vadd.f32 %v1975, %v1976
    %v1978 = vsel %vm1874, %v1862, 0.0
    %v1979 = vadd.f32 %v1977, %v1978
    %v1980 = vsel %vm1874, %v1863, 0.0
    %v1981 = vadd.f32 %v1979, %v1980
    %v1982 = vsel %vm1874, %v1864, 0.0
    %v1983 = vadd.f32 %v1981, %v1982
    %v1984 = vsel %vm1874, %v1865, 0.0
    %v1985 = vadd.f32 %v1983, %v1984
    %v1986 = vsel %vm1874, %v1866, 0.0
    %v1987 = vadd.f32 %v1985, %v1986
    %v1988 = vsel %vm1874, %v1867, 0.0
    %v1989 = vadd.f32 %v1987, %v1988
    %v1990 = vsel %vm1874, %v1868, 0.0
    %v1991 = vadd.f32 %v1989, %v1990
    %v1992 = vsel %vm1874, %v1869, 0.0
    %v1993 = vadd.f32 %v1991, %v1992
    %v1994 = vsel %vm1874, %v1870, 0.0
    %v1995 = vadd.f32 %v1993, %v1994
    %v1996 = vsel %vm1874, %v1871, 0.0
    %v1997 = vadd.f32 %v1995, %v1996
    %v1998 = vsel %vm1874, %v1872, 0.0
    %v1999 = vadd.f32 %v1997, %v1998
    %v2000 = vsel %vm1874, %v1873, 0.0
    %v2001 = vadd.f32 %v1999, %v2000
    %2002 = vadd.xlane.f32.xlu0 %v2001
    %v2003 = vpop.xlane.xlu0 %2002
    %v2004 = vrot.slane %v2003, 4
    %v2005 = vadd.f32 %v2003, %v2004
    %v2006 = vrot.slane %v2005, 2
    %v2007 = vadd.f32 %v2005, %v2006
    %v2008 = vrot.slane %v2007, 1
    %v2009 = vadd.f32 %v2007, %v2008
    %s2010 = vtos %v2009
    %v2011 = vstv %s2010
    %2012 = vst [vmem:[#allocation2] sm:$0xff] %v2011
    // Predicated region
    $region10: #{tpu_custom_call.1} parent=1 // pred_check
      _
    $region11: #{tpu_custom_call.1} parent=1 // pred_check_branch
      %2014 = sbr.rel (0) target = $region13
    $region12: #{tpu_custom_call.1} parent=1 // pred_region
      %s2016 = ssub.s32 128, 128
      %2017 = vsyncadd [#allocation3], %s2016
      %s2019 = sshll.u32 [#allocation2], 4
      %s2020 = int_to_ptr.vmem [resolvable:$true] %s2019
      %2022 = dma.vmem_to_hbm [thread:$0]  %s2020, 128, %s2, [#allocation3]
    $region13: #{tpu_custom_call.1} parent=1 // pred_fallthru
      _
    // Predicated region
    $region14: #{tpu_custom_call.1} parent=1 // pred_check
      _
    $region15: #{tpu_custom_call.1} parent=1 // pred_check_branch
      %2024 = sbr.rel (0) target = $region17
    $region16: #{tpu_custom_call.1} parent=1 // pred_region
      %2025 = dma.done [#allocation3], 128
    $region17: #{tpu_custom_call.1} parent=1 // pred_fallthru
      _
    %2026 = vsyncpa [#allocation3], 1

</llo_original>
